<compile_context>
chip_gen: v7x
topology: tpu7x:2x2x1
jax: 0.10.0
libtpu: 0.0.40
codegen_flags: <defaults>
</compile_context>

<pallas_src>
import jax
import jax.numpy as jnp
from jax.experimental import pallas as pl
from jax.experimental.pallas import tpu as pltpu

_LANES = 128                          # lane-dense last dim
_SMALL_N = 128 * 1024                 # below ~one tile: fused XLA is already at roofline
_DEFAULT_VMEM_CAP = 64 * 1024 * 1024  # v7x per-TC VMEM (most constrained generation)


def _scale_cast_kernel(x_ref, o_ref):
    # Elementwise on the VPU: multiply by 3.0, cast result to bfloat16.
    o_ref[...] = (x_ref[...] * 3.0).astype(jnp.bfloat16)


def _round_up(x: int, m: int) -> int:
    return ((x + m - 1) // m) * m


def _vmem_limit_bytes() -> int:
    """Generation-aware VMEM limit: 48 MiB on v7x (64 MiB/TC), 64 MiB on v5e/v6e."""
    try:
        cap = int(getattr(pltpu.get_tpu_info(), "vmem_capacity_bytes", 0)) or _DEFAULT_VMEM_CAP
    except Exception:
        cap = _DEFAULT_VMEM_CAP
    return min((cap * 3) // 4, 64 * 1024 * 1024)


def _choose_tiling(rows: int, in_itemsize: int):
    """Even, sublane-aligned split of `rows` into near-equal blocks.

    Returns (tile_rows, grid_steps, vmem_limit_bytes).
    """
    vmem_limit = _vmem_limit_bytes()
    bytes_per_row = _LANES * (in_itemsize + 2)          # input + bf16 output
    tile_budget = (vmem_limit * 3) // 4                 # double-buffered in+out tiles
    tile_cap = max(8, ((tile_budget // (2 * bytes_per_row)) // 8) * 8)

    # At least 2 splits so both v7x TensorCores get work; keep the number of
    # grid steps even so they balance 2-way, and each block a multiple of 8.
    splits = max(2, pl.cdiv(rows, tile_cap))
    if splits % 2:
        splits += 1
    tile_rows = min(rows, _round_up(pl.cdiv(rows, splits), 8))
    grid_steps = pl.cdiv(rows, tile_rows)
    return tile_rows, grid_steps, vmem_limit


def float16_model_forward(x: jax.Array) -> jax.Array:
    """Pallas equivalent of Float16Model.forward.

    x: float32 or bfloat16 array of arbitrary shape (e.g. NCHW).
    Returns a bfloat16 array of the same shape equal to (x * 3.0) cast to bf16.
    """
    orig_shape = x.shape
    n = x.size

    # Tiny or ragged (n % 128 != 0) inputs: a single fused XLA elementwise op
    # is already at HBM roofline; Pallas launch overhead (tiny case) or the
    # pad/trim HBM round trips (ragged case) would only slow it down.
    if n < _SMALL_N or n % _LANES != 0:
        return (x * 3.0).astype(jnp.bfloat16)

    rows = n // _LANES
    x2d = x.reshape(rows, _LANES)                       # free reshape, no HBM copy

    in_itemsize = jnp.dtype(x.dtype).itemsize
    tile_rows, grid_steps, vmem_limit = _choose_tiling(rows, in_itemsize)

    in_bytes = n * in_itemsize
    out_bytes = n * 2                                   # bf16 output

    out2d = pl.pallas_call(
        _scale_cast_kernel,
        out_shape=jax.ShapeDtypeStruct((rows, _LANES), jnp.bfloat16),
        grid_spec=pltpu.PrefetchScalarGridSpec(
            num_scalar_prefetch=0,
            grid=(grid_steps,),
            in_specs=[pl.BlockSpec((tile_rows, _LANES), lambda i: (i, 0))],
            out_specs=pl.BlockSpec((tile_rows, _LANES), lambda i: (i, 0)),
        ),
        compiler_params=pltpu.CompilerParams(
            dimension_semantics=("parallel",),          # shards grid across v7x's 2 TCs
            vmem_limit_bytes=vmem_limit,
        ),
        cost_estimate=pl.CostEstimate(
            flops=n, transcendentals=0, bytes_accessed=in_bytes + out_bytes
        ),
    )(x2d)

    return out2d.reshape(orig_shape)


if __name__ == "__main__":
    key = jax.random.PRNGKey(0)

    # Cases exercise every code path while staying small/fast:
    #   (2,4,16,16)  f32  spec-consistent NCHW, tiny -> fused-XLA bypass
    #   (3,3,17,17)  f32  n % 128 != 0 -> ragged bypass (no pad/trim round trips)
    #   (2,4,256,256) f32  4096 rows -> Pallas, 2-way balanced split
    #   (2,4,256,256) bf16 same, half the read bytes (dtype-generic kernel)
    #   (2,4,512,512) f32  16384 rows -> Pallas, multi-step balanced grid
    cases = [
        ((2, 4, 16, 16), jnp.float32),
        ((3, 3, 17, 17), jnp.float32),
        ((2, 4, 256, 256), jnp.float32),
        ((2, 4, 256, 256), jnp.bfloat16),
        ((2, 4, 512, 512), jnp.float32),
    ]

    for i, (shp, dt) in enumerate(cases):
        k = jax.random.fold_in(key, i)
        x = jax.random.normal(k, shp, dtype=dt)

        out = jax.block_until_ready(float16_model_forward(x))
        ref = (x * 3.0).astype(jnp.bfloat16)

        assert out.dtype == jnp.bfloat16, (shp, dt)
        assert out.shape == shp, (shp, dt)
        assert jnp.array_equal(
            out.astype(jnp.float32), ref.astype(jnp.float32)
        ), f"mismatch vs reference for shape {shp} dtype {dt}"

    print("KERNEL_OK")
</pallas_src>

<mosaic_0001>
module attributes {stable_mosaic.version = 11 : i64} {
  func.func @_scale_cast_kernel(%arg0: i32, %arg1: memref<2048x128xf32, #tpu.memory_space<vmem>>, %arg2: memref<2048x128xbf16, #tpu.memory_space<vmem>>) attributes {dimension_semantics = [#tpu.dimension_semantics<parallel>], iteration_bounds = array<i64: 2>, scalar_prefetch = 0 : i64, scratch_operands = 0 : i64, tpu.core_type = #tpu.core_type<tc>, window_params = [{transform_indices = @transform_0, window_bounds = array<i64: 2048, 128>}, {transform_indices = @transform_1, window_bounds = array<i64: 2048, 128>}]} {
    %c0 = arith.constant 0 : index
    %c0_0 = arith.constant 0 : index
    %0 = vector.load %arg1[%c0, %c0_0] : memref<2048x128xf32, #tpu.memory_space<vmem>>, vector<2048x128xf32>
    %cst = arith.constant 3.000000e+00 : f32
    %1 = vector.broadcast %cst : f32 to vector<2048x128xf32>
    %2 = arith.mulf %0, %1 : vector<2048x128xf32>
    %3 = arith.truncf %2 : vector<2048x128xf32> to vector<2048x128xbf16>
    %c0_1 = arith.constant 0 : index
    %c0_2 = arith.constant 0 : index
    %4 = vector.load %arg2[%c0_1, %c0_2] : memref<2048x128xbf16, #tpu.memory_space<vmem>>, vector<2048x128xbf16>
    tpu.vector_store %arg2[%c0_1, %c0_2], %3 {strides = array<i32>} : memref<2048x128xbf16, #tpu.memory_space<vmem>>, vector<2048x128xbf16>,
    return
  }
  func.func @transform_0(%arg0: i32) -> (i32, i32) {
    %c0_i32 = arith.constant 0 : i32
    %c0_i32_0 = arith.constant 0 : i32
    return %arg0, %c0_i32 : i32, i32
  }
  func.func @transform_1(%arg0: i32) -> (i32, i32) {
    %c0_i32 = arith.constant 0 : i32
    %c0_i32_0 = arith.constant 0 : i32
    return %arg0, %c0_i32 : i32, i32
  }
}

</mosaic_0001>

<llo_original>
// kernel: tpu_custom_call.1
$region0: #{tpu_custom_call.1}
  #allocation0 [shape = 'u32[]', space=smem, size = 0x4, offset = 0x4, fixed_abs, tag = 'smem constant byte address 0x4 - core index']
  #allocation1 [shape = 'u32[144,128]{1,0:T(1,128)}', space=vmem, size = 0x12000, scoped, tag = 'internal scratch']
  %s0 = inlined_call_operand.hbm [shape: f32[4096,128], index: 0, kind: input, shape index: {}]
  %s1 = inlined_call_operand.hbm [shape: bf16[4096,128], index: 1, kind: output, shape index: {}]
  %s2 = sld [smem:[#allocation0]]
  $region41: #{tpu_custom_call.1} parent=0
    _
  %s4 = ssub.s32 1, %s2
  %s5 = scalar_select 0, %s4, %s2
  $region1: #{tpu_custom_call.1} parent=0
    #allocation2 [shape = 'u8[2097152]{0}', space=vmem, size = 0x200000, scoped, tag = 'input window, operand 0']
    #allocation3 [shape = 's32[2]{0}', space=sflag, size = 0x8, scoped, tag = 'scoped memory for tpu_custom_call.1']
    #allocation4 [shape = 's32[2]{0}', space=sflag, size = 0x8, scoped, tag = 'scoped memory for tpu_custom_call.1']
    #allocation5 [shape = 'u8[1048576]{0}', space=vmem, size = 0x100000, scoped, tag = 'output window, operand 0']
    %6 = vsyncpa [#allocation3], 0
    %s7 = scalar_lea.sflag [#allocation3], 1
    %8 = vsyncpa %s7, 0
    %9 = vsyncpa [#allocation4], 0
    %s10 = scalar_lea.sflag [#allocation4], 1
    %11 = vsyncpa %s10, 0
    loop: start=0, step=1, limit=4
    $region2: #{tpu_custom_call.1} parent=1 // loop_pre_header
      _
    $region3: #{tpu_custom_call.1} parent=1 // loop_header
      %s13 = sphi 0, %s17
      %p14 = scmp.ge.s32.totalorder %s13, 4
      %s23 = sphi 0, %s25
      %s26 = sphi 0, %s23
      %s27 = sphi 0, %s26
      %s43 = sphi 0, %s27
      %s49 = sphi 0, %s51
      %s52 = sphi 0, %s49
      %s53 = sphi 0, %s52
      %s69 = sphi 0, %s53
    $region4: #{tpu_custom_call.1} parent=1 // loop_header_branch
      %16 = sbr.rel (%p14) target = $region8
    $region5: #{tpu_custom_call.1} parent=1 // loop_body
      %s18 = ssub.s32 %s13, 1
      %s19 = ssub.s32 %s13, 2
      %s20 = sadd.s32 %s13, 1
      %s21 = ssub.s32 %s13, %s20
      %p22 = scmp.eq.s32.totalorder %s21, 0
      %s24 = sadd.s32 %s23, 1
      %s25 = scalar_select %p22, %s23, %s24
      %p28 = pneg %p22
      %p29 = scmp.eq.s32.totalorder %s13, 1
      %p30 = por %p28, %p29
      %p31 = scmp.ne.s32.totalorder %s23, %s26
      %p32 = scmp.eq.s32.totalorder %s13, 0
      %p33 = por %p31, %p32
      %p34 = scmp.ne.s32.totalorder %s23, %s26
      %p35 = scmp.eq.s32.totalorder %s18, 1
      %p36 = por %p34, %p35
      %p37 = scmp.ne.s32.totalorder %s26, %s27
      %p38 = scmp.eq.s32.totalorder %s18, 0
      %p39 = por %p37, %p38
      %p40 = scmp.ne.s32.totalorder %s26, %s27
      %p41 = scmp.eq.s32.totalorder %s19, 1
      %p42 = por %p40, %p41
      %p44 = scmp.ne.s32.totalorder %s27, %s43
      %p45 = scmp.eq.s32.totalorder %s19, 0
      %p46 = por %p44, %p45
      %s47 = ssub.s32 %s13, %s20
      %p48 = scmp.eq.s32.totalorder %s47, 0
      %s50 = sadd.s32 %s49, 1
      %s51 = scalar_select %p48, %s49, %s50
      %p54 = pneg %p48
      %p55 = scmp.eq.s32.totalorder %s13, 1
      %p56 = por %p54, %p55
      %p57 = scmp.ne.s32.totalorder %s49, %s52
      %p58 = scmp.eq.s32.totalorder %s13, 0
      %p59 = por %p57, %p58
      %p60 = scmp.ne.s32.totalorder %s49, %s52
      %p61 = scmp.eq.s32.totalorder %s18, 1
      %p62 = por %p60, %p61
      %p63 = scmp.ne.s32.totalorder %s52, %s53
      %p64 = scmp.eq.s32.totalorder %s18, 0
      %p65 = por %p63, %p64
      %p66 = scmp.ne.s32.totalorder %s52, %s53
      %p67 = scmp.eq.s32.totalorder %s19, 1
      %p68 = por %p66, %p67
      %p70 = scmp.ne.s32.totalorder %s53, %s69
      %p71 = scmp.eq.s32.totalorder %s19, 0
      %p72 = por %p70, %p71
      %p73 = scmp.le.s32.totalorder 1, %s13
      %p74 = scmp.lt.s32.totalorder %s13, 3
      %p75 = pnand %p73, %p74
      %p76 = pneg %p75
      // Predicated region
      $region9: #{tpu_custom_call.1} parent=5 // pred_check
        _
      $region10: #{tpu_custom_call.1} parent=5 // pred_check_branch
        %78 = sbr.rel (%p75) target = $region12
      $region11: #{tpu_custom_call.1} parent=5 // pred_region
        %s79 = ssub.s32 %s13, 1
      $region12: #{tpu_custom_call.1} parent=5 // pred_fallthru
        _
      %p80 = scmp.lt.s32.totalorder %s13, 2
      // Predicated region
      $region13: #{tpu_custom_call.1} parent=5 // pred_check
        %p81 = pneg %p80
      $region14: #{tpu_custom_call.1} parent=5 // pred_check_branch
        %83 = sbr.rel (%p81) target = $region16
      $region15: #{tpu_custom_call.1} parent=5 // pred_region
        // Predicated region
        $region17: #{tpu_custom_call.1} parent=15 // pred_check
          %p84 = pneg %p33
        $region18: #{tpu_custom_call.1} parent=15 // pred_check_branch
          %86 = sbr.rel (%p84) target = $region20
        $region19: #{tpu_custom_call.1} parent=15 // pred_region
          %s87 = sand.u32 %s23, 1
          %s88 = scalar_lea.sflag [#allocation3], %s87
          %s89 = sand.u32 %s23, 1
          %s90 = smul.addr %s89, 2048
          %s91 = scalar_lea.vmem [#allocation2], %s90
          %s92 = smul.u32 256, %s13
          %s94 = ssub.s32 32768, 32768
          %95 = vsyncadd %s88, %s94
          %s96 = smul.addr %s92, 128
          %s97 = scalar_lea.hbm %s0, %s96
          %s98 = sshll.u32 %s91, 4
          %s99 = int_to_ptr.vmem [resolvable:$true] %s98
          %104 = dma.hbm_to_vmem [thread:$0]  %s97, 32768, %s99, %s88, 128, 128, 8
        $region20: #{tpu_custom_call.1} parent=15 // pred_fallthru
          _
      $region16: #{tpu_custom_call.1} parent=5 // pred_fallthru
        _
      %p105 = scmp.le.s32.totalorder 1, %s13
      %p106 = scmp.lt.s32.totalorder %s13, 3
      %p107 = pnand %p105, %p106
      %p108 = pneg %p107
      // Predicated region
      $region21: #{tpu_custom_call.1} parent=5 // pred_check
        _
      $region22: #{tpu_custom_call.1} parent=5 // pred_check_branch
        %110 = sbr.rel (%p107) target = $region24
      $region23: #{tpu_custom_call.1} parent=5 // pred_region
        %s111 = ssub.s32 %s13, 1
        %s112 = sand.u32 %s26, 1
        %s113 = scalar_lea.sflag [#allocation3], %s112
        %s114 = sand.u32 %s26, 1
        %s115 = smul.addr %s114, 2048
        %s116 = scalar_lea.vmem [#allocation2], %s115
        // Predicated region
        $region25: #{tpu_custom_call.1} parent=23 // pred_check
          %p117 = pneg %p39
        $region26: #{tpu_custom_call.1} parent=23 // pred_check_branch
          %119 = sbr.rel (%p117) target = $region28
        $region27: #{tpu_custom_call.1} parent=23 // pred_region
          %120 = dma.done %s113, 32768
        $region28: #{tpu_custom_call.1} parent=23 // pred_fallthru
          _
        %s121 = sand.u32 %s26, 1
        %s122 = scalar_lea.sflag [#allocation3], %s121
        %s123 = sand.u32 %s26, 1
        %s124 = smul.addr %s123, 2048
        %s125 = scalar_lea.vmem [#allocation2], %s124
        %p126 = pneg %p39
        %p127 = pneg %p36
        %p128 = pneg %p65
        %p129 = pneg %p62
        %s130 = sand.u32 %s52, 1
        %s131 = scalar_lea.sflag [#allocation4], %s130
        %s132 = sand.u32 %s52, 1
        %s133 = smul.addr %s132, 1024
        %s134 = scalar_lea.vmem [#allocation5], %s133
        %s135 = smul.u32 256, %s18
        %s136 = smul.u32 256, %s18
        %v137 = vld [vmem:[%s116] sm:$0xff]
        %v138 = vld [vmem:[%s116 + $0x8] sm:$0xff]
        %v139 = vld [vmem:[%s116 + $0x10] sm:$0xff]
        %v140 = vld [vmem:[%s116 + $0x18] sm:$0xff]
        %v141 = vld [vmem:[%s116 + $0x20] sm:$0xff]
        %v142 = vld [vmem:[%s116 + $0x28] sm:$0xff]
        %v143 = vld [vmem:[%s116 + $0x30] sm:$0xff]
        %v144 = vld [vmem:[%s116 + $0x38] sm:$0xff]
        %v145 = vld [vmem:[%s116 + $0x40] sm:$0xff]
        %v146 = vld [vmem:[%s116 + $0x48] sm:$0xff]
        %v147 = vld [vmem:[%s116 + $0x50] sm:$0xff]
        %v148 = vld [vmem:[%s116 + $0x58] sm:$0xff]
        %v149 = vld [vmem:[%s116 + $0x60] sm:$0xff]
        %v150 = vld [vmem:[%s116 + $0x68] sm:$0xff]
        %v151 = vld [vmem:[%s116 + $0x70] sm:$0xff]
        %v152 = vld [vmem:[%s116 + $0x78] sm:$0xff]
        %v153 = vld [vmem:[%s116 + $0x80] sm:$0xff]
        %v154 = vld [vmem:[%s116 + $0x88] sm:$0xff]
        %v155 = vld [vmem:[%s116 + $0x90] sm:$0xff]
        %v156 = vld [vmem:[%s116 + $0x98] sm:$0xff]
        %v157 = vld [vmem:[%s116 + $0xa0] sm:$0xff]
        %v158 = vld [vmem:[%s116 + $0xa8] sm:$0xff]
        %v159 = vld [vmem:[%s116 + $0xb0] sm:$0xff]
        %v160 = vld [vmem:[%s116 + $0xb8] sm:$0xff]
        %v161 = vld [vmem:[%s116 + $0xc0] sm:$0xff]
        %v162 = vld [vmem:[%s116 + $0xc8] sm:$0xff]
        %v163 = vld [vmem:[%s116 + $0xd0] sm:$0xff]
        %v164 = vld [vmem:[%s116 + $0xd8] sm:$0xff]
        %v165 = vld [vmem:[%s116 + $0xe0] sm:$0xff]
        %v166 = vld [vmem:[%s116 + $0xe8] sm:$0xff]
        %v167 = vld [vmem:[%s116 + $0xf0] sm:$0xff]
        %v168 = vld [vmem:[%s116 + $0xf8] sm:$0xff]
        %v169 = vld [vmem:[%s116 + $0x100] sm:$0xff]
        %v170 = vld [vmem:[%s116 + $0x108] sm:$0xff]
        %v171 = vld [vmem:[%s116 + $0x110] sm:$0xff]
        %v172 = vld [vmem:[%s116 + $0x118] sm:$0xff]
        %v173 = vld [vmem:[%s116 + $0x120] sm:$0xff]
        %v174 = vld [vmem:[%s116 + $0x128] sm:$0xff]
        %v175 = vld [vmem:[%s116 + $0x130] sm:$0xff]
        %v176 = vld [vmem:[%s116 + $0x138] sm:$0xff]
        %v177 = vld [vmem:[%s116 + $0x140] sm:$0xff]
        %v178 = vld [vmem:[%s116 + $0x148] sm:$0xff]
        %v179 = vld [vmem:[%s116 + $0x150] sm:$0xff]
        %v180 = vld [vmem:[%s116 + $0x158] sm:$0xff]
        %v181 = vld [vmem:[%s116 + $0x160] sm:$0xff]
        %v182 = vld [vmem:[%s116 + $0x168] sm:$0xff]
        %v183 = vld [vmem:[%s116 + $0x170] sm:$0xff]
        %v184 = vld [vmem:[%s116 + $0x178] sm:$0xff]
        %v185 = vld [vmem:[%s116 + $0x180] sm:$0xff]
        %v186 = vld [vmem:[%s116 + $0x188] sm:$0xff]
        %v187 = vld [vmem:[%s116 + $0x190] sm:$0xff]
        %v188 = vld [vmem:[%s116 + $0x198] sm:$0xff]
        %v189 = vld [vmem:[%s116 + $0x1a0] sm:$0xff]
        %v190 = vld [vmem:[%s116 + $0x1a8] sm:$0xff]
        %v191 = vld [vmem:[%s116 + $0x1b0] sm:$0xff]
        %v192 = vld [vmem:[%s116 + $0x1b8] sm:$0xff]
        %v193 = vld [vmem:[%s116 + $0x1c0] sm:$0xff]
        %v194 = vld [vmem:[%s116 + $0x1c8] sm:$0xff]
        %v195 = vld [vmem:[%s116 + $0x1d0] sm:$0xff]
        %v196 = vld [vmem:[%s116 + $0x1d8] sm:$0xff]
        %v197 = vld [vmem:[%s116 + $0x1e0] sm:$0xff]
        %v198 = vld [vmem:[%s116 + $0x1e8] sm:$0xff]
        %v199 = vld [vmem:[%s116 + $0x1f0] sm:$0xff]
        %v200 = vld [vmem:[%s116 + $0x1f8] sm:$0xff]
        %v201 = vld [vmem:[%s116 + $0x200] sm:$0xff]
        %v202 = vld [vmem:[%s116 + $0x208] sm:$0xff]
        %v203 = vld [vmem:[%s116 + $0x210] sm:$0xff]
        %v204 = vld [vmem:[%s116 + $0x218] sm:$0xff]
        %v205 = vld [vmem:[%s116 + $0x220] sm:$0xff]
        %v206 = vld [vmem:[%s116 + $0x228] sm:$0xff]
        %v207 = vld [vmem:[%s116 + $0x230] sm:$0xff]
        %v208 = vld [vmem:[%s116 + $0x238] sm:$0xff]
        %v209 = vld [vmem:[%s116 + $0x240] sm:$0xff]
        %v210 = vld [vmem:[%s116 + $0x248] sm:$0xff]
        %v211 = vld [vmem:[%s116 + $0x250] sm:$0xff]
        %v212 = vld [vmem:[%s116 + $0x258] sm:$0xff]
        %v213 = vld [vmem:[%s116 + $0x260] sm:$0xff]
        %v214 = vld [vmem:[%s116 + $0x268] sm:$0xff]
        %v215 = vld [vmem:[%s116 + $0x270] sm:$0xff]
        %v216 = vld [vmem:[%s116 + $0x278] sm:$0xff]
        %v217 = vld [vmem:[%s116 + $0x280] sm:$0xff]
        %v218 = vld [vmem:[%s116 + $0x288] sm:$0xff]
        %v219 = vld [vmem:[%s116 + $0x290] sm:$0xff]
        %v220 = vld [vmem:[%s116 + $0x298] sm:$0xff]
        %v221 = vld [vmem:[%s116 + $0x2a0] sm:$0xff]
        %v222 = vld [vmem:[%s116 + $0x2a8] sm:$0xff]
        %v223 = vld [vmem:[%s116 + $0x2b0] sm:$0xff]
        %v224 = vld [vmem:[%s116 + $0x2b8] sm:$0xff]
        %v225 = vld [vmem:[%s116 + $0x2c0] sm:$0xff]
        %v226 = vld [vmem:[%s116 + $0x2c8] sm:$0xff]
        %v227 = vld [vmem:[%s116 + $0x2d0] sm:$0xff]
        %v228 = vld [vmem:[%s116 + $0x2d8] sm:$0xff]
        %v229 = vld [vmem:[%s116 + $0x2e0] sm:$0xff]
        %v230 = vld [vmem:[%s116 + $0x2e8] sm:$0xff]
        %v231 = vld [vmem:[%s116 + $0x2f0] sm:$0xff]
        %v232 = vld [vmem:[%s116 + $0x2f8] sm:$0xff]
        %v233 = vld [vmem:[%s116 + $0x300] sm:$0xff]
        %v234 = vld [vmem:[%s116 + $0x308] sm:$0xff]
        %v235 = vld [vmem:[%s116 + $0x310] sm:$0xff]
        %v236 = vld [vmem:[%s116 + $0x318] sm:$0xff]
        %v237 = vld [vmem:[%s116 + $0x320] sm:$0xff]
        %v238 = vld [vmem:[%s116 + $0x328] sm:$0xff]
        %v239 = vld [vmem:[%s116 + $0x330] sm:$0xff]
        %v240 = vld [vmem:[%s116 + $0x338] sm:$0xff]
        %v241 = vld [vmem:[%s116 + $0x340] sm:$0xff]
        %v242 = vld [vmem:[%s116 + $0x348] sm:$0xff]
        %v243 = vld [vmem:[%s116 + $0x350] sm:$0xff]
        %v244 = vld [vmem:[%s116 + $0x358] sm:$0xff]
        %v245 = vld [vmem:[%s116 + $0x360] sm:$0xff]
        %v246 = vld [vmem:[%s116 + $0x368] sm:$0xff]
        %v247 = vld [vmem:[%s116 + $0x370] sm:$0xff]
        %v248 = vld [vmem:[%s116 + $0x378] sm:$0xff]
        %v249 = vld [vmem:[%s116 + $0x380] sm:$0xff]
        %v250 = vld [vmem:[%s116 + $0x388] sm:$0xff]
        %v251 = vld [vmem:[%s116 + $0x390] sm:$0xff]
        %v252 = vld [vmem:[%s116 + $0x398] sm:$0xff]
        %v253 = vld [vmem:[%s116 + $0x3a0] sm:$0xff]
        %v254 = vld [vmem:[%s116 + $0x3a8] sm:$0xff]
        %v255 = vld [vmem:[%s116 + $0x3b0] sm:$0xff]
        %v256 = vld [vmem:[%s116 + $0x3b8] sm:$0xff]
        %v257 = vld [vmem:[%s116 + $0x3c0] sm:$0xff]
        %v258 = vld [vmem:[%s116 + $0x3c8] sm:$0xff]
        %v259 = vld [vmem:[%s116 + $0x3d0] sm:$0xff]
        %v260 = vld [vmem:[%s116 + $0x3d8] sm:$0xff]
        %v261 = vld [vmem:[%s116 + $0x3e0] sm:$0xff]
        %v262 = vld [vmem:[%s116 + $0x3e8] sm:$0xff]
        %v263 = vld [vmem:[%s116 + $0x3f0] sm:$0xff]
        %v264 = vld [vmem:[%s116 + $0x3f8] sm:$0xff]
        %v265 = vld [vmem:[%s116 + $0x400] sm:$0xff]
        %v266 = vld [vmem:[%s116 + $0x408] sm:$0xff]
        %v267 = vld [vmem:[%s116 + $0x410] sm:$0xff]
        %v268 = vld [vmem:[%s116 + $0x418] sm:$0xff]
        %v269 = vld [vmem:[%s116 + $0x420] sm:$0xff]
        %v270 = vld [vmem:[%s116 + $0x428] sm:$0xff]
        %v271 = vld [vmem:[%s116 + $0x430] sm:$0xff]
        %v272 = vld [vmem:[%s116 + $0x438] sm:$0xff]
        %v273 = vld [vmem:[%s116 + $0x440] sm:$0xff]
        %v274 = vld [vmem:[%s116 + $0x448] sm:$0xff]
        %v275 = vld [vmem:[%s116 + $0x450] sm:$0xff]
        %v276 = vld [vmem:[%s116 + $0x458] sm:$0xff]
        %v277 = vld [vmem:[%s116 + $0x460] sm:$0xff]
        %v278 = vld [vmem:[%s116 + $0x468] sm:$0xff]
        %v279 = vld [vmem:[%s116 + $0x470] sm:$0xff]
        %v280 = vld [vmem:[%s116 + $0x478] sm:$0xff]
        %v281 = vld [vmem:[%s116 + $0x480] sm:$0xff]
        %v282 = vld [vmem:[%s116 + $0x488] sm:$0xff]
        %v283 = vld [vmem:[%s116 + $0x490] sm:$0xff]
        %v284 = vld [vmem:[%s116 + $0x498] sm:$0xff]
        %v285 = vld [vmem:[%s116 + $0x4a0] sm:$0xff]
        %v286 = vld [vmem:[%s116 + $0x4a8] sm:$0xff]
        %v287 = vld [vmem:[%s116 + $0x4b0] sm:$0xff]
        %v288 = vld [vmem:[%s116 + $0x4b8] sm:$0xff]
        %v289 = vld [vmem:[%s116 + $0x4c0] sm:$0xff]
        %v290 = vld [vmem:[%s116 + $0x4c8] sm:$0xff]
        %v291 = vld [vmem:[%s116 + $0x4d0] sm:$0xff]
        %v292 = vld [vmem:[%s116 + $0x4d8] sm:$0xff]
        %v293 = vld [vmem:[%s116 + $0x4e0] sm:$0xff]
        %v294 = vld [vmem:[%s116 + $0x4e8] sm:$0xff]
        %v295 = vld [vmem:[%s116 + $0x4f0] sm:$0xff]
        %v296 = vld [vmem:[%s116 + $0x4f8] sm:$0xff]
        %v297 = vld [vmem:[%s116 + $0x500] sm:$0xff]
        %v298 = vld [vmem:[%s116 + $0x508] sm:$0xff]
        %v299 = vld [vmem:[%s116 + $0x510] sm:$0xff]
        %v300 = vld [vmem:[%s116 + $0x518] sm:$0xff]
        %v301 = vld [vmem:[%s116 + $0x520] sm:$0xff]
        %v302 = vld [vmem:[%s116 + $0x528] sm:$0xff]
        %v303 = vld [vmem:[%s116 + $0x530] sm:$0xff]
        %v304 = vld [vmem:[%s116 + $0x538] sm:$0xff]
        %v305 = vld [vmem:[%s116 + $0x540] sm:$0xff]
        %v306 = vld [vmem:[%s116 + $0x548] sm:$0xff]
        %v307 = vld [vmem:[%s116 + $0x550] sm:$0xff]
        %v308 = vld [vmem:[%s116 + $0x558] sm:$0xff]
        %v309 = vld [vmem:[%s116 + $0x560] sm:$0xff]
        %v310 = vld [vmem:[%s116 + $0x568] sm:$0xff]
        %v311 = vld [vmem:[%s116 + $0x570] sm:$0xff]
        %v312 = vld [vmem:[%s116 + $0x578] sm:$0xff]
        %v313 = vld [vmem:[%s116 + $0x580] sm:$0xff]
        %v314 = vld [vmem:[%s116 + $0x588] sm:$0xff]
        %v315 = vld [vmem:[%s116 + $0x590] sm:$0xff]
        %v316 = vld [vmem:[%s116 + $0x598] sm:$0xff]
        %v317 = vld [vmem:[%s116 + $0x5a0] sm:$0xff]
        %v318 = vld [vmem:[%s116 + $0x5a8] sm:$0xff]
        %v319 = vld [vmem:[%s116 + $0x5b0] sm:$0xff]
        %v320 = vld [vmem:[%s116 + $0x5b8] sm:$0xff]
        %v321 = vld [vmem:[%s116 + $0x5c0] sm:$0xff]
        %v322 = vld [vmem:[%s116 + $0x5c8] sm:$0xff]
        %v323 = vld [vmem:[%s116 + $0x5d0] sm:$0xff]
        %v324 = vld [vmem:[%s116 + $0x5d8] sm:$0xff]
        %v325 = vld [vmem:[%s116 + $0x5e0] sm:$0xff]
        %v326 = vld [vmem:[%s116 + $0x5e8] sm:$0xff]
        %v327 = vld [vmem:[%s116 + $0x5f0] sm:$0xff]
        %v328 = vld [vmem:[%s116 + $0x5f8] sm:$0xff]
        %v329 = vld [vmem:[%s116 + $0x600] sm:$0xff]
        %v330 = vld [vmem:[%s116 + $0x608] sm:$0xff]
        %v331 = vld [vmem:[%s116 + $0x610] sm:$0xff]
        %v332 = vld [vmem:[%s116 + $0x618] sm:$0xff]
        %v333 = vld [vmem:[%s116 + $0x620] sm:$0xff]
        %v334 = vld [vmem:[%s116 + $0x628] sm:$0xff]
        %v335 = vld [vmem:[%s116 + $0x630] sm:$0xff]
        %v336 = vld [vmem:[%s116 + $0x638] sm:$0xff]
        %v337 = vld [vmem:[%s116 + $0x640] sm:$0xff]
        %v338 = vld [vmem:[%s116 + $0x648] sm:$0xff]
        %v339 = vld [vmem:[%s116 + $0x650] sm:$0xff]
        %v340 = vld [vmem:[%s116 + $0x658] sm:$0xff]
        %v341 = vld [vmem:[%s116 + $0x660] sm:$0xff]
        %v342 = vld [vmem:[%s116 + $0x668] sm:$0xff]
        %v343 = vld [vmem:[%s116 + $0x670] sm:$0xff]
        %v344 = vld [vmem:[%s116 + $0x678] sm:$0xff]
        %v345 = vld [vmem:[%s116 + $0x680] sm:$0xff]
        %v346 = vld [vmem:[%s116 + $0x688] sm:$0xff]
        %v347 = vld [vmem:[%s116 + $0x690] sm:$0xff]
        %v348 = vld [vmem:[%s116 + $0x698] sm:$0xff]
        %v349 = vld [vmem:[%s116 + $0x6a0] sm:$0xff]
        %v350 = vld [vmem:[%s116 + $0x6a8] sm:$0xff]
        %v351 = vld [vmem:[%s116 + $0x6b0] sm:$0xff]
        %v352 = vld [vmem:[%s116 + $0x6b8] sm:$0xff]
        %v353 = vld [vmem:[%s116 + $0x6c0] sm:$0xff]
        %v354 = vld [vmem:[%s116 + $0x6c8] sm:$0xff]
        %v355 = vld [vmem:[%s116 + $0x6d0] sm:$0xff]
        %v356 = vld [vmem:[%s116 + $0x6d8] sm:$0xff]
        %v357 = vld [vmem:[%s116 + $0x6e0] sm:$0xff]
        %v358 = vld [vmem:[%s116 + $0x6e8] sm:$0xff]
        %v359 = vld [vmem:[%s116 + $0x6f0] sm:$0xff]
        %v360 = vld [vmem:[%s116 + $0x6f8] sm:$0xff]
        %v361 = vld [vmem:[%s116 + $0x700] sm:$0xff]
        %v362 = vld [vmem:[%s116 + $0x708] sm:$0xff]
        %v363 = vld [vmem:[%s116 + $0x710] sm:$0xff]
        %v364 = vld [vmem:[%s116 + $0x718] sm:$0xff]
        %v365 = vld [vmem:[%s116 + $0x720] sm:$0xff]
        %v366 = vld [vmem:[%s116 + $0x728] sm:$0xff]
        %v367 = vld [vmem:[%s116 + $0x730] sm:$0xff]
        %v368 = vld [vmem:[%s116 + $0x738] sm:$0xff]
        %v369 = vld [vmem:[%s116 + $0x740] sm:$0xff]
        %v370 = vld [vmem:[%s116 + $0x748] sm:$0xff]
        %v371 = vld [vmem:[%s116 + $0x750] sm:$0xff]
        %v372 = vld [vmem:[%s116 + $0x758] sm:$0xff]
        %v373 = vld [vmem:[%s116 + $0x760] sm:$0xff]
        %v374 = vld [vmem:[%s116 + $0x768] sm:$0xff]
        %v375 = vld [vmem:[%s116 + $0x770] sm:$0xff]
        %v376 = vld [vmem:[%s116 + $0x778] sm:$0xff]
        %v377 = vld [vmem:[%s116 + $0x780] sm:$0xff]
        %v378 = vld [vmem:[%s116 + $0x788] sm:$0xff]
        %v379 = vld [vmem:[%s116 + $0x790] sm:$0xff]
        %v380 = vld [vmem:[%s116 + $0x798] sm:$0xff]
        %v381 = vld [vmem:[%s116 + $0x7a0] sm:$0xff]
        %v382 = vld [vmem:[%s116 + $0x7a8] sm:$0xff]
        %v383 = vld [vmem:[%s116 + $0x7b0] sm:$0xff]
        %v384 = vld [vmem:[%s116 + $0x7b8] sm:$0xff]
        %v385 = vld [vmem:[%s116 + $0x7c0] sm:$0xff]
        %v386 = vld [vmem:[%s116 + $0x7c8] sm:$0xff]
        %v387 = vld [vmem:[%s116 + $0x7d0] sm:$0xff]
        %v388 = vld [vmem:[%s116 + $0x7d8] sm:$0xff]
        %v389 = vld [vmem:[%s116 + $0x7e0] sm:$0xff]
        %v390 = vld [vmem:[%s116 + $0x7e8] sm:$0xff]
        %v391 = vld [vmem:[%s116 + $0x7f0] sm:$0xff]
        %v392 = vld [vmem:[%s116 + $0x7f8] sm:$0xff]
        %v393 = vmul.f32 %v137, 3.0
        %v394 = vmul.f32 %v138, 3.0
        %v395 = vmul.f32 %v139, 3.0
        %v396 = vmul.f32 %v140, 3.0
        %v397 = vmul.f32 %v141, 3.0
        %v398 = vmul.f32 %v142, 3.0
        %v399 = vmul.f32 %v143, 3.0
        %v400 = vmul.f32 %v144, 3.0
        %v401 = vmul.f32 %v145, 3.0
        %v402 = vmul.f32 %v146, 3.0
        %v403 = vmul.f32 %v147, 3.0
        %v404 = vmul.f32 %v148, 3.0
        %v405 = vmul.f32 %v149, 3.0
        %v406 = vmul.f32 %v150, 3.0
        %v407 = vmul.f32 %v151, 3.0
        %v408 = vmul.f32 %v152, 3.0
        %v409 = vmul.f32 %v153, 3.0
        %v410 = vmul.f32 %v154, 3.0
        %v411 = vmul.f32 %v155, 3.0
        %v412 = vmul.f32 %v156, 3.0
        %v413 = vmul.f32 %v157, 3.0
        %v414 = vmul.f32 %v158, 3.0
        %v415 = vmul.f32 %v159, 3.0
        %v416 = vmul.f32 %v160, 3.0
        %v417 = vmul.f32 %v161, 3.0
        %v418 = vmul.f32 %v162, 3.0
        %v419 = vmul.f32 %v163, 3.0
        %v420 = vmul.f32 %v164, 3.0
        %v421 = vmul.f32 %v165, 3.0
        %v422 = vmul.f32 %v166, 3.0
        %v423 = vmul.f32 %v167, 3.0
        %v424 = vmul.f32 %v168, 3.0
        %v425 = vmul.f32 %v169, 3.0
        %v426 = vmul.f32 %v170, 3.0
        %v427 = vmul.f32 %v171, 3.0
        %v428 = vmul.f32 %v172, 3.0
        %v429 = vmul.f32 %v173, 3.0
        %v430 = vmul.f32 %v174, 3.0
        %v431 = vmul.f32 %v175, 3.0
        %v432 = vmul.f32 %v176, 3.0
        %v433 = vmul.f32 %v177, 3.0
        %v434 = vmul.f32 %v178, 3.0
        %v435 = vmul.f32 %v179, 3.0
        %v436 = vmul.f32 %v180, 3.0
        %v437 = vmul.f32 %v181, 3.0
        %v438 = vmul.f32 %v182, 3.0
        %v439 = vmul.f32 %v183, 3.0
        %v440 = vmul.f32 %v184, 3.0
        %v441 = vmul.f32 %v185, 3.0
        %v442 = vmul.f32 %v186, 3.0
        %v443 = vmul.f32 %v187, 3.0
        %v444 = vmul.f32 %v188, 3.0
        %v445 = vmul.f32 %v189, 3.0
        %v446 = vmul.f32 %v190, 3.0
        %v447 = vmul.f32 %v191, 3.0
        %v448 = vmul.f32 %v192, 3.0
        %v449 = vmul.f32 %v193, 3.0
        %v450 = vmul.f32 %v194, 3.0
        %v451 = vmul.f32 %v195, 3.0
        %v452 = vmul.f32 %v196, 3.0
        %v453 = vmul.f32 %v197, 3.0
        %v454 = vmul.f32 %v198, 3.0
        %v455 = vmul.f32 %v199, 3.0
        %v456 = vmul.f32 %v200, 3.0
        %v457 = vmul.f32 %v201, 3.0
        %v458 = vmul.f32 %v202, 3.0
        %v459 = vmul.f32 %v203, 3.0
        %v460 = vmul.f32 %v204, 3.0
        %v461 = vmul.f32 %v205, 3.0
        %v462 = vmul.f32 %v206, 3.0
        %v463 = vmul.f32 %v207, 3.0
        %v464 = vmul.f32 %v208, 3.0
        %v465 = vmul.f32 %v209, 3.0
        %v466 = vmul.f32 %v210, 3.0
        %v467 = vmul.f32 %v211, 3.0
        %v468 = vmul.f32 %v212, 3.0
        %v469 = vmul.f32 %v213, 3.0
        %v470 = vmul.f32 %v214, 3.0
        %v471 = vmul.f32 %v215, 3.0
        %v472 = vmul.f32 %v216, 3.0
        %v473 = vmul.f32 %v217, 3.0
        %v474 = vmul.f32 %v218, 3.0
        %v475 = vmul.f32 %v219, 3.0
        %v476 = vmul.f32 %v220, 3.0
        %v477 = vmul.f32 %v221, 3.0
        %v478 = vmul.f32 %v222, 3.0
        %v479 = vmul.f32 %v223, 3.0
        %v480 = vmul.f32 %v224, 3.0
        %v481 = vmul.f32 %v225, 3.0
        %v482 = vmul.f32 %v226, 3.0
        %v483 = vmul.f32 %v227, 3.0
        %v484 = vmul.f32 %v228, 3.0
        %v485 = vmul.f32 %v229, 3.0
        %v486 = vmul.f32 %v230, 3.0
        %v487 = vmul.f32 %v231, 3.0
        %v488 = vmul.f32 %v232, 3.0
        %v489 = vmul.f32 %v233, 3.0
        %v490 = vmul.f32 %v234, 3.0
        %v491 = vmul.f32 %v235, 3.0
        %v492 = vmul.f32 %v236, 3.0
        %v493 = vmul.f32 %v237, 3.0
        %v494 = vmul.f32 %v238, 3.0
        %v495 = vmul.f32 %v239, 3.0
        %v496 = vmul.f32 %v240, 3.0
        %v497 = vmul.f32 %v241, 3.0
        %v498 = vmul.f32 %v242, 3.0
        %v499 = vmul.f32 %v243, 3.0
        %v500 = vmul.f32 %v244, 3.0
        %v501 = vmul.f32 %v245, 3.0
        %v502 = vmul.f32 %v246, 3.0
        %v503 = vmul.f32 %v247, 3.0
        %v504 = vmul.f32 %v248, 3.0
        %v505 = vmul.f32 %v249, 3.0
        %v506 = vmul.f32 %v250, 3.0
        %v507 = vmul.f32 %v251, 3.0
        %v508 = vmul.f32 %v252, 3.0
        %v509 = vmul.f32 %v253, 3.0
        %v510 = vmul.f32 %v254, 3.0
        %v511 = vmul.f32 %v255, 3.0
        %v512 = vmul.f32 %v256, 3.0
        %v513 = vmul.f32 %v257, 3.0
        %v514 = vmul.f32 %v258, 3.0
        %v515 = vmul.f32 %v259, 3.0
        %v516 = vmul.f32 %v260, 3.0
        %v517 = vmul.f32 %v261, 3.0
        %v518 = vmul.f32 %v262, 3.0
        %v519 = vmul.f32 %v263, 3.0
        %v520 = vmul.f32 %v264, 3.0
        %v521 = vmul.f32 %v265, 3.0
        %v522 = vmul.f32 %v266, 3.0
        %v523 = vmul.f32 %v267, 3.0
        %v524 = vmul.f32 %v268, 3.0
        %v525 = vmul.f32 %v269, 3.0
        %v526 = vmul.f32 %v270, 3.0
        %v527 = vmul.f32 %v271, 3.0
        %v528 = vmul.f32 %v272, 3.0
        %v529 = vmul.f32 %v273, 3.0
        %v530 = vmul.f32 %v274, 3.0
        %v531 = vmul.f32 %v275, 3.0
        %v532 = vmul.f32 %v276, 3.0
        %v533 = vmul.f32 %v277, 3.0
        %v534 = vmul.f32 %v278, 3.0
        %v535 = vmul.f32 %v279, 3.0
        %v536 = vmul.f32 %v280, 3.0
        %v537 = vmul.f32 %v281, 3.0
        %v538 = vmul.f32 %v282, 3.0
        %v539 = vmul.f32 %v283, 3.0
        %v540 = vmul.f32 %v284, 3.0
        %v541 = vmul.f32 %v285, 3.0
        %v542 = vmul.f32 %v286, 3.0
        %v543 = vmul.f32 %v287, 3.0
        %v544 = vmul.f32 %v288, 3.0
        %v545 = vmul.f32 %v289, 3.0
        %v546 = vmul.f32 %v290, 3.0
        %v547 = vmul.f32 %v291, 3.0
        %v548 = vmul.f32 %v292, 3.0
        %v549 = vmul.f32 %v293, 3.0
        %v550 = vmul.f32 %v294, 3.0
        %v551 = vmul.f32 %v295, 3.0
        %v552 = vmul.f32 %v296, 3.0
        %v553 = vmul.f32 %v297, 3.0
        %v554 = vmul.f32 %v298, 3.0
        %v555 = vmul.f32 %v299, 3.0
        %v556 = vmul.f32 %v300, 3.0
        %v557 = vmul.f32 %v301, 3.0
        %v558 = vmul.f32 %v302, 3.0
        %v559 = vmul.f32 %v303, 3.0
        %v560 = vmul.f32 %v304, 3.0
        %v561 = vmul.f32 %v305, 3.0
        %v562 = vmul.f32 %v306, 3.0
        %v563 = vmul.f32 %v307, 3.0
        %v564 = vmul.f32 %v308, 3.0
        %v565 = vmul.f32 %v309, 3.0
        %v566 = vmul.f32 %v310, 3.0
        %v567 = vmul.f32 %v311, 3.0
        %v568 = vmul.f32 %v312, 3.0
        %v569 = vmul.f32 %v313, 3.0
        %v570 = vmul.f32 %v314, 3.0
        %v571 = vmul.f32 %v315, 3.0
        %v572 = vmul.f32 %v316, 3.0
        %v573 = vmul.f32 %v317, 3.0
        %v574 = vmul.f32 %v318, 3.0
        %v575 = vmul.f32 %v319, 3.0
        %v576 = vmul.f32 %v320, 3.0
        %v577 = vmul.f32 %v321, 3.0
        %v578 = vmul.f32 %v322, 3.0
        %v579 = vmul.f32 %v323, 3.0
        %v580 = vmul.f32 %v324, 3.0
        %v581 = vmul.f32 %v325, 3.0
        %v582 = vmul.f32 %v326, 3.0
        %v583 = vmul.f32 %v327, 3.0
        %v584 = vmul.f32 %v328, 3.0
        %v585 = vmul.f32 %v329, 3.0
        %v586 = vmul.f32 %v330, 3.0
        %v587 = vmul.f32 %v331, 3.0
        %v588 = vmul.f32 %v332, 3.0
        %v589 = vmul.f32 %v333, 3.0
        %v590 = vmul.f32 %v334, 3.0
        %v591 = vmul.f32 %v335, 3.0
        %v592 = vmul.f32 %v336, 3.0
        %v593 = vmul.f32 %v337, 3.0
        %v594 = vmul.f32 %v338, 3.0
        %v595 = vmul.f32 %v339, 3.0
        %v596 = vmul.f32 %v340, 3.0
        %v597 = vmul.f32 %v341, 3.0
        %v598 = vmul.f32 %v342, 3.0
        %v599 = vmul.f32 %v343, 3.0
        %v600 = vmul.f32 %v344, 3.0
        %v601 = vmul.f32 %v345, 3.0
        %v602 = vmul.f32 %v346, 3.0
        %v603 = vmul.f32 %v347, 3.0
        %v604 = vmul.f32 %v348, 3.0
        %v605 = vmul.f32 %v349, 3.0
        %v606 = vmul.f32 %v350, 3.0
        %v607 = vmul.f32 %v351, 3.0
        %v608 = vmul.f32 %v352, 3.0
        %v609 = vmul.f32 %v353, 3.0
        %v610 = vmul.f32 %v354, 3.0
        %v611 = vmul.f32 %v355, 3.0
        %v612 = vmul.f32 %v356, 3.0
        %v613 = vmul.f32 %v357, 3.0
        %v614 = vmul.f32 %v358, 3.0
        %v615 = vmul.f32 %v359, 3.0
        %v616 = vmul.f32 %v360, 3.0
        %v617 = vmul.f32 %v361, 3.0
        %v618 = vmul.f32 %v362, 3.0
        %v619 = vmul.f32 %v363, 3.0
        %v620 = vmul.f32 %v364, 3.0
        %v621 = vmul.f32 %v365, 3.0
        %v622 = vmul.f32 %v366, 3.0
        %v623 = vmul.f32 %v367, 3.0
        %v624 = vmul.f32 %v368, 3.0
        %v625 = vmul.f32 %v369, 3.0
        %v626 = vmul.f32 %v370, 3.0
        %v627 = vmul.f32 %v371, 3.0
        %v628 = vmul.f32 %v372, 3.0
        %v629 = vmul.f32 %v373, 3.0
        %v630 = vmul.f32 %v374, 3.0
        %v631 = vmul.f32 %v375, 3.0
        %v632 = vmul.f32 %v376, 3.0
        %v633 = vmul.f32 %v377, 3.0
        %v634 = vmul.f32 %v378, 3.0
        %v635 = vmul.f32 %v379, 3.0
        %v636 = vmul.f32 %v380, 3.0
        %v637 = vmul.f32 %v381, 3.0
        %v638 = vmul.f32 %v382, 3.0
        %v639 = vmul.f32 %v383, 3.0
        %v640 = vmul.f32 %v384, 3.0
        %v641 = vmul.f32 %v385, 3.0
        %v642 = vmul.f32 %v386, 3.0
        %v643 = vmul.f32 %v387, 3.0
        %v644 = vmul.f32 %v388, 3.0
        %v645 = vmul.f32 %v389, 3.0
        %v646 = vmul.f32 %v390, 3.0
        %v647 = vmul.f32 %v391, 3.0
        %v648 = vmul.f32 %v392, 3.0
        %v649 = vpack.c.bf16 %v394, %v393
        %v650 = vpack.c.bf16 %v396, %v395
        %v651 = vpack.c.bf16 %v398, %v397
        %v652 = vpack.c.bf16 %v400, %v399
        %v653 = vpack.c.bf16 %v402, %v401
        %v654 = vpack.c.bf16 %v404, %v403
        %v655 = vpack.c.bf16 %v406, %v405
        %v656 = vpack.c.bf16 %v408, %v407
        %v657 = vpack.c.bf16 %v410, %v409
        %v658 = vpack.c.bf16 %v412, %v411
        %v659 = vpack.c.bf16 %v414, %v413
        %v660 = vpack.c.bf16 %v416, %v415
        %v661 = vpack.c.bf16 %v418, %v417
        %v662 = vpack.c.bf16 %v420, %v419
        %v663 = vpack.c.bf16 %v422, %v421
        %v664 = vpack.c.bf16 %v424, %v423
        %v665 = vpack.c.bf16 %v426, %v425
        %v666 = vpack.c.bf16 %v428, %v427
        %v667 = vpack.c.bf16 %v430, %v429
        %v668 = vpack.c.bf16 %v432, %v431
        %v669 = vpack.c.bf16 %v434, %v433
        %v670 = vpack.c.bf16 %v436, %v435
        %v671 = vpack.c.bf16 %v438, %v437
        %v672 = vpack.c.bf16 %v440, %v439
        %v673 = vpack.c.bf16 %v442, %v441
        %v674 = vpack.c.bf16 %v444, %v443
        %v675 = vpack.c.bf16 %v446, %v445
        %v676 = vpack.c.bf16 %v448, %v447
        %v677 = vpack.c.bf16 %v450, %v449
        %v678 = vpack.c.bf16 %v452, %v451
        %v679 = vpack.c.bf16 %v454, %v453
        %v680 = vpack.c.bf16 %v456, %v455
        %v681 = vpack.c.bf16 %v458, %v457
        %v682 = vpack.c.bf16 %v460, %v459
        %v683 = vpack.c.bf16 %v462, %v461
        %v684 = vpack.c.bf16 %v464, %v463
        %v685 = vpack.c.bf16 %v466, %v465
        %v686 = vpack.c.bf16 %v468, %v467
        %v687 = vpack.c.bf16 %v470, %v469
        %v688 = vpack.c.bf16 %v472, %v471
        %v689 = vpack.c.bf16 %v474, %v473
        %v690 = vpack.c.bf16 %v476, %v475
        %v691 = vpack.c.bf16 %v478, %v477
        %v692 = vpack.c.bf16 %v480, %v479
        %v693 = vpack.c.bf16 %v482, %v481
        %v694 = vpack.c.bf16 %v484, %v483
        %v695 = vpack.c.bf16 %v486, %v485
        %v696 = vpack.c.bf16 %v488, %v487
        %v697 = vpack.c.bf16 %v490, %v489
        %v698 = vpack.c.bf16 %v492, %v491
        %v699 = vpack.c.bf16 %v494, %v493
        %v700 = vpack.c.bf16 %v496, %v495
        %v701 = vpack.c.bf16 %v498, %v497
        %v702 = vpack.c.bf16 %v500, %v499
        %v703 = vpack.c.bf16 %v502, %v501
        %v704 = vpack.c.bf16 %v504, %v503
        %v705 = vpack.c.bf16 %v506, %v505
        %v706 = vpack.c.bf16 %v508, %v507
        %v707 = vpack.c.bf16 %v510, %v509
        %v708 = vpack.c.bf16 %v512, %v511
        %v709 = vpack.c.bf16 %v514, %v513
        %v710 = vpack.c.bf16 %v516, %v515
        %v711 = vpack.c.bf16 %v518, %v517
        %v712 = vpack.c.bf16 %v520, %v519
        %v713 = vpack.c.bf16 %v522, %v521
        %v714 = vpack.c.bf16 %v524, %v523
        %v715 = vpack.c.bf16 %v526, %v525
        %v716 = vpack.c.bf16 %v528, %v527
        %v717 = vpack.c.bf16 %v530, %v529
        %v718 = vpack.c.bf16 %v532, %v531
        %v719 = vpack.c.bf16 %v534, %v533
        %v720 = vpack.c.bf16 %v536, %v535
        %v721 = vpack.c.bf16 %v538, %v537
        %v722 = vpack.c.bf16 %v540, %v539
        %v723 = vpack.c.bf16 %v542, %v541
        %v724 = vpack.c.bf16 %v544, %v543
        %v725 = vpack.c.bf16 %v546, %v545
        %v726 = vpack.c.bf16 %v548, %v547
        %v727 = vpack.c.bf16 %v550, %v549
        %v728 = vpack.c.bf16 %v552, %v551
        %v729 = vpack.c.bf16 %v554, %v553
        %v730 = vpack.c.bf16 %v556, %v555
        %v731 = vpack.c.bf16 %v558, %v557
        %v732 = vpack.c.bf16 %v560, %v559
        %v733 = vpack.c.bf16 %v562, %v561
        %v734 = vpack.c.bf16 %v564, %v563
        %v735 = vpack.c.bf16 %v566, %v565
        %v736 = vpack.c.bf16 %v568, %v567
        %v737 = vpack.c.bf16 %v570, %v569
        %v738 = vpack.c.bf16 %v572, %v571
        %v739 = vpack.c.bf16 %v574, %v573
        %v740 = vpack.c.bf16 %v576, %v575
        %v741 = vpack.c.bf16 %v578, %v577
        %v742 = vpack.c.bf16 %v580, %v579
        %v743 = vpack.c.bf16 %v582, %v581
        %v744 = vpack.c.bf16 %v584, %v583
        %v745 = vpack.c.bf16 %v586, %v585
        %v746 = vpack.c.bf16 %v588, %v587
        %v747 = vpack.c.bf16 %v590, %v589
        %v748 = vpack.c.bf16 %v592, %v591
        %v749 = vpack.c.bf16 %v594, %v593
        %v750 = vpack.c.bf16 %v596, %v595
        %v751 = vpack.c.bf16 %v598, %v597
        %v752 = vpack.c.bf16 %v600, %v599
        %v753 = vpack.c.bf16 %v602, %v601
        %v754 = vpack.c.bf16 %v604, %v603
        %v755 = vpack.c.bf16 %v606, %v605
        %v756 = vpack.c.bf16 %v608, %v607
        %v757 = vpack.c.bf16 %v610, %v609
        %v758 = vpack.c.bf16 %v612, %v611
        %v759 = vpack.c.bf16 %v614, %v613
        %v760 = vpack.c.bf16 %v616, %v615
        %v761 = vpack.c.bf16 %v618, %v617
        %v762 = vpack.c.bf16 %v620, %v619
        %v763 = vpack.c.bf16 %v622, %v621
        %v764 = vpack.c.bf16 %v624, %v623
        %v765 = vpack.c.bf16 %v626, %v625
        %v766 = vpack.c.bf16 %v628, %v627
        %v767 = vpack.c.bf16 %v630, %v629
        %v768 = vpack.c.bf16 %v632, %v631
        %v769 = vpack.c.bf16 %v634, %v633
        %v770 = vpack.c.bf16 %v636, %v635
        %v771 = vpack.c.bf16 %v638, %v637
        %v772 = vpack.c.bf16 %v640, %v639
        %v773 = vpack.c.bf16 %v642, %v641
        %v774 = vpack.c.bf16 %v644, %v643
        %v775 = vpack.c.bf16 %v646, %v645
        %v776 = vpack.c.bf16 %v648, %v647
        %v905 = vunpack.c.l.b16 %v649
        %v906 = vunpack.c.h.b16 %v649
        %v907 = vunpack.c.l.b16 %v650
        %v908 = vunpack.c.h.b16 %v650
        %v909 = vunpack.c.l.b16 %v651
        %v910 = vunpack.c.h.b16 %v651
        %v911 = vunpack.c.l.b16 %v652
        %v912 = vunpack.c.h.b16 %v652
        %v913 = vunpack.c.l.b16 %v653
        %v914 = vunpack.c.h.b16 %v653
        %v915 = vunpack.c.l.b16 %v654
        %v916 = vunpack.c.h.b16 %v654
        %v917 = vunpack.c.l.b16 %v655
        %v918 = vunpack.c.h.b16 %v655
        %v919 = vunpack.c.l.b16 %v656
        %v920 = vunpack.c.h.b16 %v656
        %v921 = vunpack.c.l.b16 %v657
        %v922 = vunpack.c.h.b16 %v657
        %v923 = vunpack.c.l.b16 %v658
        %v924 = vunpack.c.h.b16 %v658
        %v925 = vunpack.c.l.b16 %v659
        %v926 = vunpack.c.h.b16 %v659
        %v927 = vunpack.c.l.b16 %v660
        %v928 = vunpack.c.h.b16 %v660
        %v929 = vunpack.c.l.b16 %v661
        %v930 = vunpack.c.h.b16 %v661
        %v931 = vunpack.c.l.b16 %v662
        %v932 = vunpack.c.h.b16 %v662
        %v933 = vunpack.c.l.b16 %v663
        %v934 = vunpack.c.h.b16 %v663
        %v935 = vunpack.c.l.b16 %v664
        %v936 = vunpack.c.h.b16 %v664
        %v937 = vunpack.c.l.b16 %v665
        %v938 = vunpack.c.h.b16 %v665
        %v939 = vunpack.c.l.b16 %v666
        %v940 = vunpack.c.h.b16 %v666
        %v941 = vunpack.c.l.b16 %v667
        %v942 = vunpack.c.h.b16 %v667
        %v943 = vunpack.c.l.b16 %v668
        %v944 = vunpack.c.h.b16 %v668
        %v945 = vunpack.c.l.b16 %v669
        %v946 = vunpack.c.h.b16 %v669
        %v947 = vunpack.c.l.b16 %v670
        %v948 = vunpack.c.h.b16 %v670
        %v949 = vunpack.c.l.b16 %v671
        %v950 = vunpack.c.h.b16 %v671
        %v951 = vunpack.c.l.b16 %v672
        %v952 = vunpack.c.h.b16 %v672
        %v953 = vunpack.c.l.b16 %v673
        %v954 = vunpack.c.h.b16 %v673
        %v955 = vunpack.c.l.b16 %v674
        %v956 = vunpack.c.h.b16 %v674
        %v957 = vunpack.c.l.b16 %v675
        %v958 = vunpack.c.h.b16 %v675
        %v959 = vunpack.c.l.b16 %v676
        %v960 = vunpack.c.h.b16 %v676
        %v961 = vunpack.c.l.b16 %v677
        %v962 = vunpack.c.h.b16 %v677
        %v963 = vunpack.c.l.b16 %v678
        %v964 = vunpack.c.h.b16 %v678
        %v965 = vunpack.c.l.b16 %v679
        %v966 = vunpack.c.h.b16 %v679
        %v967 = vunpack.c.l.b16 %v680
        %v968 = vunpack.c.h.b16 %v680
        %v969 = vunpack.c.l.b16 %v681
        %v970 = vunpack.c.h.b16 %v681
        %v971 = vunpack.c.l.b16 %v682
        %v972 = vunpack.c.h.b16 %v682
        %v973 = vunpack.c.l.b16 %v683
        %v974 = vunpack.c.h.b16 %v683
        %v975 = vunpack.c.l.b16 %v684
        %v976 = vunpack.c.h.b16 %v684
        %v977 = vunpack.c.l.b16 %v685
        %v978 = vunpack.c.h.b16 %v685
        %v979 = vunpack.c.l.b16 %v686
        %v980 = vunpack.c.h.b16 %v686
        %v981 = vunpack.c.l.b16 %v687
        %v982 = vunpack.c.h.b16 %v687
        %v983 = vunpack.c.l.b16 %v688
        %v984 = vunpack.c.h.b16 %v688
        %v985 = vunpack.c.l.b16 %v689
        %v986 = vunpack.c.h.b16 %v689
        %v987 = vunpack.c.l.b16 %v690
        %v988 = vunpack.c.h.b16 %v690
        %v989 = vunpack.c.l.b16 %v691
        %v990 = vunpack.c.h.b16 %v691
        %v991 = vunpack.c.l.b16 %v692
        %v992 = vunpack.c.h.b16 %v692
        %v993 = vunpack.c.l.b16 %v693
        %v994 = vunpack.c.h.b16 %v693
        %v995 = vunpack.c.l.b16 %v694
        %v996 = vunpack.c.h.b16 %v694
        %v997 = vunpack.c.l.b16 %v695
        %v998 = vunpack.c.h.b16 %v695
        %v999 = vunpack.c.l.b16 %v696
        %v1000 = vunpack.c.h.b16 %v696
        %v1001 = vunpack.c.l.b16 %v697
        %v1002 = vunpack.c.h.b16 %v697
        %v1003 = vunpack.c.l.b16 %v698
        %v1004 = vunpack.c.h.b16 %v698
        %v1005 = vunpack.c.l.b16 %v699
        %v1006 = vunpack.c.h.b16 %v699
        %v1007 = vunpack.c.l.b16 %v700
        %v1008 = vunpack.c.h.b16 %v700
        %v1009 = vunpack.c.l.b16 %v701
        %v1010 = vunpack.c.h.b16 %v701
        %v1011 = vunpack.c.l.b16 %v702
        %v1012 = vunpack.c.h.b16 %v702
        %v1013 = vunpack.c.l.b16 %v703
        %v1014 = vunpack.c.h.b16 %v703
        %v1015 = vunpack.c.l.b16 %v704
        %v1016 = vunpack.c.h.b16 %v704
        %v1017 = vunpack.c.l.b16 %v705
        %v1018 = vunpack.c.h.b16 %v705
        %v1019 = vunpack.c.l.b16 %v706
        %v1020 = vunpack.c.h.b16 %v706
        %v1021 = vunpack.c.l.b16 %v707
        %v1022 = vunpack.c.h.b16 %v707
        %v1023 = vunpack.c.l.b16 %v708
        %v1024 = vunpack.c.h.b16 %v708
        %v1025 = vunpack.c.l.b16 %v709
        %v1026 = vunpack.c.h.b16 %v709
        %v1027 = vunpack.c.l.b16 %v710
        %v1028 = vunpack.c.h.b16 %v710
        %v1029 = vunpack.c.l.b16 %v711
        %v1030 = vunpack.c.h.b16 %v711
        %v1031 = vunpack.c.l.b16 %v712
        %v1032 = vunpack.c.h.b16 %v712
        %v1033 = vunpack.c.l.b16 %v713
        %v1034 = vunpack.c.h.b16 %v713
        %v1035 = vunpack.c.l.b16 %v714
        %v1036 = vunpack.c.h.b16 %v714
        %v1037 = vunpack.c.l.b16 %v715
        %v1038 = vunpack.c.h.b16 %v715
        %v1039 = vunpack.c.l.b16 %v716
        %v1040 = vunpack.c.h.b16 %v716
        %v1041 = vunpack.c.l.b16 %v717
        %v1042 = vunpack.c.h.b16 %v717
        %v1043 = vunpack.c.l.b16 %v718
        %v1044 = vunpack.c.h.b16 %v718
        %v1045 = vunpack.c.l.b16 %v719
        %v1046 = vunpack.c.h.b16 %v719
        %v1047 = vunpack.c.l.b16 %v720
        %v1048 = vunpack.c.h.b16 %v720
        %v1049 = vunpack.c.l.b16 %v721
        %v1050 = vunpack.c.h.b16 %v721
        %v1051 = vunpack.c.l.b16 %v722
        %v1052 = vunpack.c.h.b16 %v722
        %v1053 = vunpack.c.l.b16 %v723
        %v1054 = vunpack.c.h.b16 %v723
        %v1055 = vunpack.c.l.b16 %v724
        %v1056 = vunpack.c.h.b16 %v724
        %v1057 = vunpack.c.l.b16 %v725
        %v1058 = vunpack.c.h.b16 %v725
        %v1059 = vunpack.c.l.b16 %v726
        %v1060 = vunpack.c.h.b16 %v726
        %v1061 = vunpack.c.l.b16 %v727
        %v1062 = vunpack.c.h.b16 %v727
        %v1063 = vunpack.c.l.b16 %v728
        %v1064 = vunpack.c.h.b16 %v728
        %v1065 = vunpack.c.l.b16 %v729
        %v1066 = vunpack.c.h.b16 %v729
        %v1067 = vunpack.c.l.b16 %v730
        %v1068 = vunpack.c.h.b16 %v730
        %v1069 = vunpack.c.l.b16 %v731
        %v1070 = vunpack.c.h.b16 %v731
        %v1071 = vunpack.c.l.b16 %v732
        %v1072 = vunpack.c.h.b16 %v732
        %v1073 = vunpack.c.l.b16 %v733
        %v1074 = vunpack.c.h.b16 %v733
        %v1075 = vunpack.c.l.b16 %v734
        %v1076 = vunpack.c.h.b16 %v734
        %v1077 = vunpack.c.l.b16 %v735
        %v1078 = vunpack.c.h.b16 %v735
        %v1079 = vunpack.c.l.b16 %v736
        %v1080 = vunpack.c.h.b16 %v736
        %v1081 = vunpack.c.l.b16 %v737
        %v1082 = vunpack.c.h.b16 %v737
        %v1083 = vunpack.c.l.b16 %v738
        %v1084 = vunpack.c.h.b16 %v738
        %v1085 = vunpack.c.l.b16 %v739
        %v1086 = vunpack.c.h.b16 %v739
        %v1087 = vunpack.c.l.b16 %v740
        %v1088 = vunpack.c.h.b16 %v740
        %v1089 = vunpack.c.l.b16 %v741
        %v1090 = vunpack.c.h.b16 %v741
        %v1091 = vunpack.c.l.b16 %v742
        %v1092 = vunpack.c.h.b16 %v742
        %v1093 = vunpack.c.l.b16 %v743
        %v1094 = vunpack.c.h.b16 %v743
        %v1095 = vunpack.c.l.b16 %v744
        %v1096 = vunpack.c.h.b16 %v744
        %v1097 = vunpack.c.l.b16 %v745
        %v1098 = vunpack.c.h.b16 %v745
        %v1099 = vunpack.c.l.b16 %v746
        %v1100 = vunpack.c.h.b16 %v746
        %v1101 = vunpack.c.l.b16 %v747
        %v1102 = vunpack.c.h.b16 %v747
        %v1103 = vunpack.c.l.b16 %v748
        %v1104 = vunpack.c.h.b16 %v748
        %v1105 = vunpack.c.l.b16 %v749
        %v1106 = vunpack.c.h.b16 %v749
        %v1107 = vunpack.c.l.b16 %v750
        %v1108 = vunpack.c.h.b16 %v750
        %v1109 = vunpack.c.l.b16 %v751
        %v1110 = vunpack.c.h.b16 %v751
        %v1111 = vunpack.c.l.b16 %v752
        %v1112 = vunpack.c.h.b16 %v752
        %v1113 = vunpack.c.l.b16 %v753
        %v1114 = vunpack.c.h.b16 %v753
        %v1115 = vunpack.c.l.b16 %v754
        %v1116 = vunpack.c.h.b16 %v754
        %v1117 = vunpack.c.l.b16 %v755
        %v1118 = vunpack.c.h.b16 %v755
        %v1119 = vunpack.c.l.b16 %v756
        %v1120 = vunpack.c.h.b16 %v756
        %v1121 = vunpack.c.l.b16 %v757
        %v1122 = vunpack.c.h.b16 %v757
        %v1123 = vunpack.c.l.b16 %v758
        %v1124 = vunpack.c.h.b16 %v758
        %v1125 = vunpack.c.l.b16 %v759
        %v1126 = vunpack.c.h.b16 %v759
        %v1127 = vunpack.c.l.b16 %v760
        %v1128 = vunpack.c.h.b16 %v760
        %v1129 = vunpack.c.l.b16 %v761
        %v1130 = vunpack.c.h.b16 %v761
        %v1131 = vunpack.c.l.b16 %v762
        %v1132 = vunpack.c.h.b16 %v762
        %v1133 = vunpack.c.l.b16 %v763
        %v1134 = vunpack.c.h.b16 %v763
        %v1135 = vunpack.c.l.b16 %v764
        %v1136 = vunpack.c.h.b16 %v764
        %v1137 = vunpack.c.l.b16 %v765
        %v1138 = vunpack.c.h.b16 %v765
        %v1139 = vunpack.c.l.b16 %v766
        %v1140 = vunpack.c.h.b16 %v766
        %v1141 = vunpack.c.l.b16 %v767
        %v1142 = vunpack.c.h.b16 %v767
        %v1143 = vunpack.c.l.b16 %v768
        %v1144 = vunpack.c.h.b16 %v768
        %v1145 = vunpack.c.l.b16 %v769
        %v1146 = vunpack.c.h.b16 %v769
        %v1147 = vunpack.c.l.b16 %v770
        %v1148 = vunpack.c.h.b16 %v770
        %v1149 = vunpack.c.l.b16 %v771
        %v1150 = vunpack.c.h.b16 %v771
        %v1151 = vunpack.c.l.b16 %v772
        %v1152 = vunpack.c.h.b16 %v772
        %v1153 = vunpack.c.l.b16 %v773
        %v1154 = vunpack.c.h.b16 %v773
        %v1155 = vunpack.c.l.b16 %v774
        %v1156 = vunpack.c.h.b16 %v774
        %v1157 = vunpack.c.l.b16 %v775
        %v1158 = vunpack.c.h.b16 %v775
        %v1159 = vunpack.c.l.b16 %v776
        %v1160 = vunpack.c.h.b16 %v776
        %v1161 = vpack.c.b16 %v905, %v905
        %v1162 = vpack.c.b16 %v906, %v906
        %v1163 = vpack.c.b16 %v907, %v907
        %v1164 = vpack.c.b16 %v908, %v908
        %v1165 = vpack.c.b16 %v909, %v909
        %v1166 = vpack.c.b16 %v910, %v910
        %v1167 = vpack.c.b16 %v911, %v911
        %v1168 = vpack.c.b16 %v912, %v912
        %v1169 = vpack.c.b16 %v913, %v913
        %v1170 = vpack.c.b16 %v914, %v914
        %v1171 = vpack.c.b16 %v915, %v915
        %v1172 = vpack.c.b16 %v916, %v916
        %v1173 = vpack.c.b16 %v917, %v917
        %v1174 = vpack.c.b16 %v918, %v918
        %v1175 = vpack.c.b16 %v919, %v919
        %v1176 = vpack.c.b16 %v920, %v920
        %v1177 = vpack.c.b16 %v921, %v921
        %v1178 = vpack.c.b16 %v922, %v922
        %v1179 = vpack.c.b16 %v923, %v923
        %v1180 = vpack.c.b16 %v924, %v924
        %v1181 = vpack.c.b16 %v925, %v925
        %v1182 = vpack.c.b16 %v926, %v926
        %v1183 = vpack.c.b16 %v927, %v927
        %v1184 = vpack.c.b16 %v928, %v928
        %v1185 = vpack.c.b16 %v929, %v929
        %v1186 = vpack.c.b16 %v930, %v930
        %v1187 = vpack.c.b16 %v931, %v931
        %v1188 = vpack.c.b16 %v932, %v932
        %v1189 = vpack.c.b16 %v933, %v933
        %v1190 = vpack.c.b16 %v934, %v934
        %v1191 = vpack.c.b16 %v935, %v935
        %v1192 = vpack.c.b16 %v936, %v936
        %v1193 = vpack.c.b16 %v937, %v937
        %v1194 = vpack.c.b16 %v938, %v938
        %v1195 = vpack.c.b16 %v939, %v939
        %v1196 = vpack.c.b16 %v940, %v940
        %v1197 = vpack.c.b16 %v941, %v941
        %v1198 = vpack.c.b16 %v942, %v942
        %v1199 = vpack.c.b16 %v943, %v943
        %v1200 = vpack.c.b16 %v944, %v944
        %v1201 = vpack.c.b16 %v945, %v945
        %v1202 = vpack.c.b16 %v946, %v946
        %v1203 = vpack.c.b16 %v947, %v947
        %v1204 = vpack.c.b16 %v948, %v948
        %v1205 = vpack.c.b16 %v949, %v949
        %v1206 = vpack.c.b16 %v950, %v950
        %v1207 = vpack.c.b16 %v951, %v951
        %v1208 = vpack.c.b16 %v952, %v952
        %v1209 = vpack.c.b16 %v953, %v953
        %v1210 = vpack.c.b16 %v954, %v954
        %v1211 = vpack.c.b16 %v955, %v955
        %v1212 = vpack.c.b16 %v956, %v956
        %v1213 = vpack.c.b16 %v957, %v957
        %v1214 = vpack.c.b16 %v958, %v958
        %v1215 = vpack.c.b16 %v959, %v959
        %v1216 = vpack.c.b16 %v960, %v960
        %v1217 = vpack.c.b16 %v961, %v961
        %v1218 = vpack.c.b16 %v962, %v962
        %v1219 = vpack.c.b16 %v963, %v963
        %v1220 = vpack.c.b16 %v964, %v964
        %v1221 = vpack.c.b16 %v965, %v965
        %v1222 = vpack.c.b16 %v966, %v966
        %v1223 = vpack.c.b16 %v967, %v967
        %v1224 = vpack.c.b16 %v968, %v968
        %v1225 = vpack.c.b16 %v969, %v969
        %v1226 = vpack.c.b16 %v970, %v970
        %v1227 = vpack.c.b16 %v971, %v971
        %v1228 = vpack.c.b16 %v972, %v972
        %v1229 = vpack.c.b16 %v973, %v973
        %v1230 = vpack.c.b16 %v974, %v974
        %v1231 = vpack.c.b16 %v975, %v975
        %v1232 = vpack.c.b16 %v976, %v976
        %v1233 = vpack.c.b16 %v977, %v977
        %v1234 = vpack.c.b16 %v978, %v978
        %v1235 = vpack.c.b16 %v979, %v979
        %v1236 = vpack.c.b16 %v980, %v980
        %v1237 = vpack.c.b16 %v981, %v981
        %v1238 = vpack.c.b16 %v982, %v982
        %v1239 = vpack.c.b16 %v983, %v983
        %v1240 = vpack.c.b16 %v984, %v984
        %v1241 = vpack.c.b16 %v985, %v985
        %v1242 = vpack.c.b16 %v986, %v986
        %v1243 = vpack.c.b16 %v987, %v987
        %v1244 = vpack.c.b16 %v988, %v988
        %v1245 = vpack.c.b16 %v989, %v989
        %v1246 = vpack.c.b16 %v990, %v990
        %v1247 = vpack.c.b16 %v991, %v991
        %v1248 = vpack.c.b16 %v992, %v992
        %v1249 = vpack.c.b16 %v993, %v993
        %v1250 = vpack.c.b16 %v994, %v994
        %v1251 = vpack.c.b16 %v995, %v995
        %v1252 = vpack.c.b16 %v996, %v996
        %v1253 = vpack.c.b16 %v997, %v997
        %v1254 = vpack.c.b16 %v998, %v998
        %v1255 = vpack.c.b16 %v999, %v999
        %v1256 = vpack.c.b16 %v1000, %v1000
        %v1257 = vpack.c.b16 %v1001, %v1001
        %v1258 = vpack.c.b16 %v1002, %v1002
        %v1259 = vpack.c.b16 %v1003, %v1003
        %v1260 = vpack.c.b16 %v1004, %v1004
        %v1261 = vpack.c.b16 %v1005, %v1005
        %v1262 = vpack.c.b16 %v1006, %v1006
        %v1263 = vpack.c.b16 %v1007, %v1007
        %v1264 = vpack.c.b16 %v1008, %v1008
        %v1265 = vpack.c.b16 %v1009, %v1009
        %v1266 = vpack.c.b16 %v1010, %v1010
        %v1267 = vpack.c.b16 %v1011, %v1011
        %v1268 = vpack.c.b16 %v1012, %v1012
        %v1269 = vpack.c.b16 %v1013, %v1013
        %v1270 = vpack.c.b16 %v1014, %v1014
        %v1271 = vpack.c.b16 %v1015, %v1015
        %v1272 = vpack.c.b16 %v1016, %v1016
        %v1273 = vpack.c.b16 %v1017, %v1017
        %v1274 = vpack.c.b16 %v1018, %v1018
        %v1275 = vpack.c.b16 %v1019, %v1019
        %v1276 = vpack.c.b16 %v1020, %v1020
        %v1277 = vpack.c.b16 %v1021, %v1021
        %v1278 = vpack.c.b16 %v1022, %v1022
        %v1279 = vpack.c.b16 %v1023, %v1023
        %v1280 = vpack.c.b16 %v1024, %v1024
        %v1281 = vpack.c.b16 %v1025, %v1025
        %v1282 = vpack.c.b16 %v1026, %v1026
        %v1283 = vpack.c.b16 %v1027, %v1027
        %v1284 = vpack.c.b16 %v1028, %v1028
        %v1285 = vpack.c.b16 %v1029, %v1029
        %v1286 = vpack.c.b16 %v1030, %v1030
        %v1287 = vpack.c.b16 %v1031, %v1031
        %v1288 = vpack.c.b16 %v1032, %v1032
        %v1289 = vpack.c.b16 %v1033, %v1033
        %v1290 = vpack.c.b16 %v1034, %v1034
        %v1291 = vpack.c.b16 %v1035, %v1035
        %v1292 = vpack.c.b16 %v1036, %v1036
        %v1293 = vpack.c.b16 %v1037, %v1037
        %v1294 = vpack.c.b16 %v1038, %v1038
        %v1295 = vpack.c.b16 %v1039, %v1039
        %v1296 = vpack.c.b16 %v1040, %v1040
        %v1297 = vpack.c.b16 %v1041, %v1041
        %v1298 = vpack.c.b16 %v1042, %v1042
        %v1299 = vpack.c.b16 %v1043, %v1043
        %v1300 = vpack.c.b16 %v1044, %v1044
        %v1301 = vpack.c.b16 %v1045, %v1045
        %v1302 = vpack.c.b16 %v1046, %v1046
        %v1303 = vpack.c.b16 %v1047, %v1047
        %v1304 = vpack.c.b16 %v1048, %v1048
        %v1305 = vpack.c.b16 %v1049, %v1049
        %v1306 = vpack.c.b16 %v1050, %v1050
        %v1307 = vpack.c.b16 %v1051, %v1051
        %v1308 = vpack.c.b16 %v1052, %v1052
        %v1309 = vpack.c.b16 %v1053, %v1053
        %v1310 = vpack.c.b16 %v1054, %v1054
        %v1311 = vpack.c.b16 %v1055, %v1055
        %v1312 = vpack.c.b16 %v1056, %v1056
        %v1313 = vpack.c.b16 %v1057, %v1057
        %v1314 = vpack.c.b16 %v1058, %v1058
        %v1315 = vpack.c.b16 %v1059, %v1059
        %v1316 = vpack.c.b16 %v1060, %v1060
        %v1317 = vpack.c.b16 %v1061, %v1061
        %v1318 = vpack.c.b16 %v1062, %v1062
        %v1319 = vpack.c.b16 %v1063, %v1063
        %v1320 = vpack.c.b16 %v1064, %v1064
        %v1321 = vpack.c.b16 %v1065, %v1065
        %v1322 = vpack.c.b16 %v1066, %v1066
        %v1323 = vpack.c.b16 %v1067, %v1067
        %v1324 = vpack.c.b16 %v1068, %v1068
        %v1325 = vpack.c.b16 %v1069, %v1069
        %v1326 = vpack.c.b16 %v1070, %v1070
        %v1327 = vpack.c.b16 %v1071, %v1071
        %v1328 = vpack.c.b16 %v1072, %v1072
        %v1329 = vpack.c.b16 %v1073, %v1073
        %v1330 = vpack.c.b16 %v1074, %v1074
        %v1331 = vpack.c.b16 %v1075, %v1075
        %v1332 = vpack.c.b16 %v1076, %v1076
        %v1333 = vpack.c.b16 %v1077, %v1077
        %v1334 = vpack.c.b16 %v1078, %v1078
        %v1335 = vpack.c.b16 %v1079, %v1079
        %v1336 = vpack.c.b16 %v1080, %v1080
        %v1337 = vpack.c.b16 %v1081, %v1081
        %v1338 = vpack.c.b16 %v1082, %v1082
        %v1339 = vpack.c.b16 %v1083, %v1083
        %v1340 = vpack.c.b16 %v1084, %v1084
        %v1341 = vpack.c.b16 %v1085, %v1085
        %v1342 = vpack.c.b16 %v1086, %v1086
        %v1343 = vpack.c.b16 %v1087, %v1087
        %v1344 = vpack.c.b16 %v1088, %v1088
        %v1345 = vpack.c.b16 %v1089, %v1089
        %v1346 = vpack.c.b16 %v1090, %v1090
        %v1347 = vpack.c.b16 %v1091, %v1091
        %v1348 = vpack.c.b16 %v1092, %v1092
        %v1349 = vpack.c.b16 %v1093, %v1093
        %v1350 = vpack.c.b16 %v1094, %v1094
        %v1351 = vpack.c.b16 %v1095, %v1095
        %v1352 = vpack.c.b16 %v1096, %v1096
        %v1353 = vpack.c.b16 %v1097, %v1097
        %v1354 = vpack.c.b16 %v1098, %v1098
        %v1355 = vpack.c.b16 %v1099, %v1099
        %v1356 = vpack.c.b16 %v1100, %v1100
        %v1357 = vpack.c.b16 %v1101, %v1101
        %v1358 = vpack.c.b16 %v1102, %v1102
        %v1359 = vpack.c.b16 %v1103, %v1103
        %v1360 = vpack.c.b16 %v1104, %v1104
        %v1361 = vpack.c.b16 %v1105, %v1105
        %v1362 = vpack.c.b16 %v1106, %v1106
        %v1363 = vpack.c.b16 %v1107, %v1107
        %v1364 = vpack.c.b16 %v1108, %v1108
        %v1365 = vpack.c.b16 %v1109, %v1109
        %v1366 = vpack.c.b16 %v1110, %v1110
        %v1367 = vpack.c.b16 %v1111, %v1111
        %v1368 = vpack.c.b16 %v1112, %v1112
        %v1369 = vpack.c.b16 %v1113, %v1113
        %v1370 = vpack.c.b16 %v1114, %v1114
        %v1371 = vpack.c.b16 %v1115, %v1115
        %v1372 = vpack.c.b16 %v1116, %v1116
        %v1373 = vpack.c.b16 %v1117, %v1117
        %v1374 = vpack.c.b16 %v1118, %v1118
        %v1375 = vpack.c.b16 %v1119, %v1119
        %v1376 = vpack.c.b16 %v1120, %v1120
        %v1377 = vpack.c.b16 %v1121, %v1121
        %v1378 = vpack.c.b16 %v1122, %v1122
        %v1379 = vpack.c.b16 %v1123, %v1123
        %v1380 = vpack.c.b16 %v1124, %v1124
        %v1381 = vpack.c.b16 %v1125, %v1125
        %v1382 = vpack.c.b16 %v1126, %v1126
        %v1383 = vpack.c.b16 %v1127, %v1127
        %v1384 = vpack.c.b16 %v1128, %v1128
        %v1385 = vpack.c.b16 %v1129, %v1129
        %v1386 = vpack.c.b16 %v1130, %v1130
        %v1387 = vpack.c.b16 %v1131, %v1131
        %v1388 = vpack.c.b16 %v1132, %v1132
        %v1389 = vpack.c.b16 %v1133, %v1133
        %v1390 = vpack.c.b16 %v1134, %v1134
        %v1391 = vpack.c.b16 %v1135, %v1135
        %v1392 = vpack.c.b16 %v1136, %v1136
        %v1393 = vpack.c.b16 %v1137, %v1137
        %v1394 = vpack.c.b16 %v1138, %v1138
        %v1395 = vpack.c.b16 %v1139, %v1139
        %v1396 = vpack.c.b16 %v1140, %v1140
        %v1397 = vpack.c.b16 %v1141, %v1141
        %v1398 = vpack.c.b16 %v1142, %v1142
        %v1399 = vpack.c.b16 %v1143, %v1143
        %v1400 = vpack.c.b16 %v1144, %v1144
        %v1401 = vpack.c.b16 %v1145, %v1145
        %v1402 = vpack.c.b16 %v1146, %v1146
        %v1403 = vpack.c.b16 %v1147, %v1147
        %v1404 = vpack.c.b16 %v1148, %v1148
        %v1405 = vpack.c.b16 %v1149, %v1149
        %v1406 = vpack.c.b16 %v1150, %v1150
        %v1407 = vpack.c.b16 %v1151, %v1151
        %v1408 = vpack.c.b16 %v1152, %v1152
        %v1409 = vpack.c.b16 %v1153, %v1153
        %v1410 = vpack.c.b16 %v1154, %v1154
        %v1411 = vpack.c.b16 %v1155, %v1155
        %v1412 = vpack.c.b16 %v1156, %v1156
        %v1413 = vpack.c.b16 %v1157, %v1157
        %v1414 = vpack.c.b16 %v1158, %v1158
        %v1415 = vpack.c.b16 %v1159, %v1159
        %v1416 = vpack.c.b16 %v1160, %v1160
        %1673 = vst [vmem:[%s134] sm:$0xf] %v1161
        %1674 = vst [vmem:[%s134 + $0x4] sm:$0xf] %v1162
        %1675 = vst [vmem:[%s134 + $0x8] sm:$0xf] %v1163
        %1676 = vst [vmem:[%s134 + $0xc] sm:$0xf] %v1164
        %1677 = vst [vmem:[%s134 + $0x10] sm:$0xf] %v1165
        %1678 = vst [vmem:[%s134 + $0x14] sm:$0xf] %v1166
        %1679 = vst [vmem:[%s134 + $0x18] sm:$0xf] %v1167
        %1680 = vst [vmem:[%s134 + $0x1c] sm:$0xf] %v1168
        %1681 = vst [vmem:[%s134 + $0x20] sm:$0xf] %v1169
        %1682 = vst [vmem:[%s134 + $0x24] sm:$0xf] %v1170
        %1683 = vst [vmem:[%s134 + $0x28] sm:$0xf] %v1171
        %1684 = vst [vmem:[%s134 + $0x2c] sm:$0xf] %v1172
        %1685 = vst [vmem:[%s134 + $0x30] sm:$0xf] %v1173
        %1686 = vst [vmem:[%s134 + $0x34] sm:$0xf] %v1174
        %1687 = vst [vmem:[%s134 + $0x38] sm:$0xf] %v1175
        %1688 = vst [vmem:[%s134 + $0x3c] sm:$0xf] %v1176
        %1689 = vst [vmem:[%s134 + $0x40] sm:$0xf] %v1177
        %1690 = vst [vmem:[%s134 + $0x44] sm:$0xf] %v1178
        %1691 = vst [vmem:[%s134 + $0x48] sm:$0xf] %v1179
        %1692 = vst [vmem:[%s134 + $0x4c] sm:$0xf] %v1180
        %1693 = vst [vmem:[%s134 + $0x50] sm:$0xf] %v1181
        %1694 = vst [vmem:[%s134 + $0x54] sm:$0xf] %v1182
        %1695 = vst [vmem:[%s134 + $0x58] sm:$0xf] %v1183
        %1696 = vst [vmem:[%s134 + $0x5c] sm:$0xf] %v1184
        %1697 = vst [vmem:[%s134 + $0x60] sm:$0xf] %v1185
        %1698 = vst [vmem:[%s134 + $0x64] sm:$0xf] %v1186
        %1699 = vst [vmem:[%s134 + $0x68] sm:$0xf] %v1187
        %1700 = vst [vmem:[%s134 + $0x6c] sm:$0xf] %v1188
        %1701 = vst [vmem:[%s134 + $0x70] sm:$0xf] %v1189
        %1702 = vst [vmem:[%s134 + $0x74] sm:$0xf] %v1190
        %1703 = vst [vmem:[%s134 + $0x78] sm:$0xf] %v1191
        %1704 = vst [vmem:[%s134 + $0x7c] sm:$0xf] %v1192
        %1705 = vst [vmem:[%s134 + $0x80] sm:$0xf] %v1193
        %1706 = vst [vmem:[%s134 + $0x84] sm:$0xf] %v1194
        %1707 = vst [vmem:[%s134 + $0x88] sm:$0xf] %v1195
        %1708 = vst [vmem:[%s134 + $0x8c] sm:$0xf] %v1196
        %1709 = vst [vmem:[%s134 + $0x90] sm:$0xf] %v1197
        %1710 = vst [vmem:[%s134 + $0x94] sm:$0xf] %v1198
        %1711 = vst [vmem:[%s134 + $0x98] sm:$0xf] %v1199
        %1712 = vst [vmem:[%s134 + $0x9c] sm:$0xf] %v1200
        %1713 = vst [vmem:[%s134 + $0xa0] sm:$0xf] %v1201
        %1714 = vst [vmem:[%s134 + $0xa4] sm:$0xf] %v1202
        %1715 = vst [vmem:[%s134 + $0xa8] sm:$0xf] %v1203
        %1716 = vst [vmem:[%s134 + $0xac] sm:$0xf] %v1204
        %1717 = vst [vmem:[%s134 + $0xb0] sm:$0xf] %v1205
        %1718 = vst [vmem:[%s134 + $0xb4] sm:$0xf] %v1206
        %1719 = vst [vmem:[%s134 + $0xb8] sm:$0xf] %v1207
        %1720 = vst [vmem:[%s134 + $0xbc] sm:$0xf] %v1208
        %1721 = vst [vmem:[%s134 + $0xc0] sm:$0xf] %v1209
        %1722 = vst [vmem:[%s134 + $0xc4] sm:$0xf] %v1210
        %1723 = vst [vmem:[%s134 + $0xc8] sm:$0xf] %v1211
        %1724 = vst [vmem:[%s134 + $0xcc] sm:$0xf] %v1212
        %1725 = vst [vmem:[%s134 + $0xd0] sm:$0xf] %v1213
        %1726 = vst [vmem:[%s134 + $0xd4] sm:$0xf] %v1214
        %1727 = vst [vmem:[%s134 + $0xd8] sm:$0xf] %v1215
        %1728 = vst [vmem:[%s134 + $0xdc] sm:$0xf] %v1216
        %1729 = vst [vmem:[%s134 + $0xe0] sm:$0xf] %v1217
        %1730 = vst [vmem:[%s134 + $0xe4] sm:$0xf] %v1218
        %1731 = vst [vmem:[%s134 + $0xe8] sm:$0xf] %v1219
        %1732 = vst [vmem:[%s134 + $0xec] sm:$0xf] %v1220
        %1733 = vst [vmem:[%s134 + $0xf0] sm:$0xf] %v1221
        %1734 = vst [vmem:[%s134 + $0xf4] sm:$0xf] %v1222
        %1735 = vst [vmem:[%s134 + $0xf8] sm:$0xf] %v1223
        %1736 = vst [vmem:[%s134 + $0xfc] sm:$0xf] %v1224
        %1737 = vst [vmem:[%s134 + $0x100] sm:$0xf] %v1225
        %1738 = vst [vmem:[%s134 + $0x104] sm:$0xf] %v1226
        %1739 = vst [vmem:[%s134 + $0x108] sm:$0xf] %v1227
        %1740 = vst [vmem:[%s134 + $0x10c] sm:$0xf] %v1228
        %1741 = vst [vmem:[%s134 + $0x110] sm:$0xf] %v1229
        %1742 = vst [vmem:[%s134 + $0x114] sm:$0xf] %v1230
        %1743 = vst [vmem:[%s134 + $0x118] sm:$0xf] %v1231
        %1744 = vst [vmem:[%s134 + $0x11c] sm:$0xf] %v1232
        %1745 = vst [vmem:[%s134 + $0x120] sm:$0xf] %v1233
        %1746 = vst [vmem:[%s134 + $0x124] sm:$0xf] %v1234
        %1747 = vst [vmem:[%s134 + $0x128] sm:$0xf] %v1235
        %1748 = vst [vmem:[%s134 + $0x12c] sm:$0xf] %v1236
        %1749 = vst [vmem:[%s134 + $0x130] sm:$0xf] %v1237
        %1750 = vst [vmem:[%s134 + $0x134] sm:$0xf] %v1238
        %1751 = vst [vmem:[%s134 + $0x138] sm:$0xf] %v1239
        %1752 = vst [vmem:[%s134 + $0x13c] sm:$0xf] %v1240
        %1753 = vst [vmem:[%s134 + $0x140] sm:$0xf] %v1241
        %1754 = vst [vmem:[%s134 + $0x144] sm:$0xf] %v1242
        %1755 = vst [vmem:[%s134 + $0x148] sm:$0xf] %v1243
        %1756 = vst [vmem:[%s134 + $0x14c] sm:$0xf] %v1244
        %1757 = vst [vmem:[%s134 + $0x150] sm:$0xf] %v1245
        %1758 = vst [vmem:[%s134 + $0x154] sm:$0xf] %v1246
        %1759 = vst [vmem:[%s134 + $0x158] sm:$0xf] %v1247
        %1760 = vst [vmem:[%s134 + $0x15c] sm:$0xf] %v1248
        %1761 = vst [vmem:[%s134 + $0x160] sm:$0xf] %v1249
        %1762 = vst [vmem:[%s134 + $0x164] sm:$0xf] %v1250
        %1763 = vst [vmem:[%s134 + $0x168] sm:$0xf] %v1251
        %1764 = vst [vmem:[%s134 + $0x16c] sm:$0xf] %v1252
        %1765 = vst [vmem:[%s134 + $0x170] sm:$0xf] %v1253
        %1766 = vst [vmem:[%s134 + $0x174] sm:$0xf] %v1254
        %1767 = vst [vmem:[%s134 + $0x178] sm:$0xf] %v1255
        %1768 = vst [vmem:[%s134 + $0x17c] sm:$0xf] %v1256
        %1769 = vst [vmem:[%s134 + $0x180] sm:$0xf] %v1257
        %1770 = vst [vmem:[%s134 + $0x184] sm:$0xf] %v1258
        %1771 = vst [vmem:[%s134 + $0x188] sm:$0xf] %v1259
        %1772 = vst [vmem:[%s134 + $0x18c] sm:$0xf] %v1260
        %1773 = vst [vmem:[%s134 + $0x190] sm:$0xf] %v1261
        %1774 = vst [vmem:[%s134 + $0x194] sm:$0xf] %v1262
        %1775 = vst [vmem:[%s134 + $0x198] sm:$0xf] %v1263
        %1776 = vst [vmem:[%s134 + $0x19c] sm:$0xf] %v1264
        %1777 = vst [vmem:[%s134 + $0x1a0] sm:$0xf] %v1265
        %1778 = vst [vmem:[%s134 + $0x1a4] sm:$0xf] %v1266
        %1779 = vst [vmem:[%s134 + $0x1a8] sm:$0xf] %v1267
        %1780 = vst [vmem:[%s134 + $0x1ac] sm:$0xf] %v1268
        %1781 = vst [vmem:[%s134 + $0x1b0] sm:$0xf] %v1269
        %1782 = vst [vmem:[%s134 + $0x1b4] sm:$0xf] %v1270
        %1783 = vst [vmem:[%s134 + $0x1b8] sm:$0xf] %v1271
        %1784 = vst [vmem:[%s134 + $0x1bc] sm:$0xf] %v1272
        %1785 = vst [vmem:[%s134 + $0x1c0] sm:$0xf] %v1273
        %1786 = vst [vmem:[%s134 + $0x1c4] sm:$0xf] %v1274
        %1787 = vst [vmem:[%s134 + $0x1c8] sm:$0xf] %v1275
        %1788 = vst [vmem:[%s134 + $0x1cc] sm:$0xf] %v1276
        %1789 = vst [vmem:[%s134 + $0x1d0] sm:$0xf] %v1277
        %1790 = vst [vmem:[%s134 + $0x1d4] sm:$0xf] %v1278
        %1791 = vst [vmem:[%s134 + $0x1d8] sm:$0xf] %v1279
        %1792 = vst [vmem:[%s134 + $0x1dc] sm:$0xf] %v1280
        %1793 = vst [vmem:[%s134 + $0x1e0] sm:$0xf] %v1281
        %1794 = vst [vmem:[%s134 + $0x1e4] sm:$0xf] %v1282
        %1795 = vst [vmem:[%s134 + $0x1e8] sm:$0xf] %v1283
        %1796 = vst [vmem:[%s134 + $0x1ec] sm:$0xf] %v1284
        %1797 = vst [vmem:[%s134 + $0x1f0] sm:$0xf] %v1285
        %1798 = vst [vmem:[%s134 + $0x1f4] sm:$0xf] %v1286
        %1799 = vst [vmem:[%s134 + $0x1f8] sm:$0xf] %v1287
        %1800 = vst [vmem:[%s134 + $0x1fc] sm:$0xf] %v1288
        %1801 = vst [vmem:[%s134 + $0x200] sm:$0xf] %v1289
        %1802 = vst [vmem:[%s134 + $0x204] sm:$0xf] %v1290
        %1803 = vst [vmem:[%s134 + $0x208] sm:$0xf] %v1291
        %1804 = vst [vmem:[%s134 + $0x20c] sm:$0xf] %v1292
        %1805 = vst [vmem:[%s134 + $0x210] sm:$0xf] %v1293
        %1806 = vst [vmem:[%s134 + $0x214] sm:$0xf] %v1294
        %1807 = vst [vmem:[%s134 + $0x218] sm:$0xf] %v1295
        %1808 = vst [vmem:[%s134 + $0x21c] sm:$0xf] %v1296
        %1809 = vst [vmem:[%s134 + $0x220] sm:$0xf] %v1297
        %1810 = vst [vmem:[%s134 + $0x224] sm:$0xf] %v1298
        %1811 = vst [vmem:[%s134 + $0x228] sm:$0xf] %v1299
        %1812 = vst [vmem:[%s134 + $0x22c] sm:$0xf] %v1300
        %1813 = vst [vmem:[%s134 + $0x230] sm:$0xf] %v1301
        %1814 = vst [vmem:[%s134 + $0x234] sm:$0xf] %v1302
        %1815 = vst [vmem:[%s134 + $0x238] sm:$0xf] %v1303
        %1816 = vst [vmem:[%s134 + $0x23c] sm:$0xf] %v1304
        %1817 = vst [vmem:[%s134 + $0x240] sm:$0xf] %v1305
        %1818 = vst [vmem:[%s134 + $0x244] sm:$0xf] %v1306
        %1819 = vst [vmem:[%s134 + $0x248] sm:$0xf] %v1307
        %1820 = vst [vmem:[%s134 + $0x24c] sm:$0xf] %v1308
        %1821 = vst [vmem:[%s134 + $0x250] sm:$0xf] %v1309
        %1822 = vst [vmem:[%s134 + $0x254] sm:$0xf] %v1310
        %1823 = vst [vmem:[%s134 + $0x258] sm:$0xf] %v1311
        %1824 = vst [vmem:[%s134 + $0x25c] sm:$0xf] %v1312
        %1825 = vst [vmem:[%s134 + $0x260] sm:$0xf] %v1313
        %1826 = vst [vmem:[%s134 + $0x264] sm:$0xf] %v1314
        %1827 = vst [vmem:[%s134 + $0x268] sm:$0xf] %v1315
        %1828 = vst [vmem:[%s134 + $0x26c] sm:$0xf] %v1316
        %1829 = vst [vmem:[%s134 + $0x270] sm:$0xf] %v1317
        %1830 = vst [vmem:[%s134 + $0x274] sm:$0xf] %v1318
        %1831 = vst [vmem:[%s134 + $0x278] sm:$0xf] %v1319
        %1832 = vst [vmem:[%s134 + $0x27c] sm:$0xf] %v1320
        %1833 = vst [vmem:[%s134 + $0x280] sm:$0xf] %v1321
        %1834 = vst [vmem:[%s134 + $0x284] sm:$0xf] %v1322
        %1835 = vst [vmem:[%s134 + $0x288] sm:$0xf] %v1323
        %1836 = vst [vmem:[%s134 + $0x28c] sm:$0xf] %v1324
        %1837 = vst [vmem:[%s134 + $0x290] sm:$0xf] %v1325
        %1838 = vst [vmem:[%s134 + $0x294] sm:$0xf] %v1326
        %1839 = vst [vmem:[%s134 + $0x298] sm:$0xf] %v1327
        %1840 = vst [vmem:[%s134 + $0x29c] sm:$0xf] %v1328
        %1841 = vst [vmem:[%s134 + $0x2a0] sm:$0xf] %v1329
        %1842 = vst [vmem:[%s134 + $0x2a4] sm:$0xf] %v1330
        %1843 = vst [vmem:[%s134 + $0x2a8] sm:$0xf] %v1331
        %1844 = vst [vmem:[%s134 + $0x2ac] sm:$0xf] %v1332
        %1845 = vst [vmem:[%s134 + $0x2b0] sm:$0xf] %v1333
        %1846 = vst [vmem:[%s134 + $0x2b4] sm:$0xf] %v1334
        %1847 = vst [vmem:[%s134 + $0x2b8] sm:$0xf] %v1335
        %1848 = vst [vmem:[%s134 + $0x2bc] sm:$0xf] %v1336
        %1849 = vst [vmem:[%s134 + $0x2c0] sm:$0xf] %v1337
        %1850 = vst [vmem:[%s134 + $0x2c4] sm:$0xf] %v1338
        %1851 = vst [vmem:[%s134 + $0x2c8] sm:$0xf] %v1339
        %1852 = vst [vmem:[%s134 + $0x2cc] sm:$0xf] %v1340
        %1853 = vst [vmem:[%s134 + $0x2d0] sm:$0xf] %v1341
        %1854 = vst [vmem:[%s134 + $0x2d4] sm:$0xf] %v1342
        %1855 = vst [vmem:[%s134 + $0x2d8] sm:$0xf] %v1343
        %1856 = vst [vmem:[%s134 + $0x2dc] sm:$0xf] %v1344
        %1857 = vst [vmem:[%s134 + $0x2e0] sm:$0xf] %v1345
        %1858 = vst [vmem:[%s134 + $0x2e4] sm:$0xf] %v1346
        %1859 = vst [vmem:[%s134 + $0x2e8] sm:$0xf] %v1347
        %1860 = vst [vmem:[%s134 + $0x2ec] sm:$0xf] %v1348
        %1861 = vst [vmem:[%s134 + $0x2f0] sm:$0xf] %v1349
        %1862 = vst [vmem:[%s134 + $0x2f4] sm:$0xf] %v1350
        %1863 = vst [vmem:[%s134 + $0x2f8] sm:$0xf] %v1351
        %1864 = vst [vmem:[%s134 + $0x2fc] sm:$0xf] %v1352
        %1865 = vst [vmem:[%s134 + $0x300] sm:$0xf] %v1353
        %1866 = vst [vmem:[%s134 + $0x304] sm:$0xf] %v1354
        %1867 = vst [vmem:[%s134 + $0x308] sm:$0xf] %v1355
        %1868 = vst [vmem:[%s134 + $0x30c] sm:$0xf] %v1356
        %1869 = vst [vmem:[%s134 + $0x310] sm:$0xf] %v1357
        %1870 = vst [vmem:[%s134 + $0x314] sm:$0xf] %v1358
        %1871 = vst [vmem:[%s134 + $0x318] sm:$0xf] %v1359
        %1872 = vst [vmem:[%s134 + $0x31c] sm:$0xf] %v1360
        %1873 = vst [vmem:[%s134 + $0x320] sm:$0xf] %v1361
        %1874 = vst [vmem:[%s134 + $0x324] sm:$0xf] %v1362
        %1875 = vst [vmem:[%s134 + $0x328] sm:$0xf] %v1363
        %1876 = vst [vmem:[%s134 + $0x32c] sm:$0xf] %v1364
        %1877 = vst [vmem:[%s134 + $0x330] sm:$0xf] %v1365
        %1878 = vst [vmem:[%s134 + $0x334] sm:$0xf] %v1366
        %1879 = vst [vmem:[%s134 + $0x338] sm:$0xf] %v1367
        %1880 = vst [vmem:[%s134 + $0x33c] sm:$0xf] %v1368
        %1881 = vst [vmem:[%s134 + $0x340] sm:$0xf] %v1369
        %1882 = vst [vmem:[%s134 + $0x344] sm:$0xf] %v1370
        %1883 = vst [vmem:[%s134 + $0x348] sm:$0xf] %v1371
        %1884 = vst [vmem:[%s134 + $0x34c] sm:$0xf] %v1372
        %1885 = vst [vmem:[%s134 + $0x350] sm:$0xf] %v1373
        %1886 = vst [vmem:[%s134 + $0x354] sm:$0xf] %v1374
        %1887 = vst [vmem:[%s134 + $0x358] sm:$0xf] %v1375
        %1888 = vst [vmem:[%s134 + $0x35c] sm:$0xf] %v1376
        %1889 = vst [vmem:[%s134 + $0x360] sm:$0xf] %v1377
        %1890 = vst [vmem:[%s134 + $0x364] sm:$0xf] %v1378
        %1891 = vst [vmem:[%s134 + $0x368] sm:$0xf] %v1379
        %1892 = vst [vmem:[%s134 + $0x36c] sm:$0xf] %v1380
        %1893 = vst [vmem:[%s134 + $0x370] sm:$0xf] %v1381
        %1894 = vst [vmem:[%s134 + $0x374] sm:$0xf] %v1382
        %1895 = vst [vmem:[%s134 + $0x378] sm:$0xf] %v1383
        %1896 = vst [vmem:[%s134 + $0x37c] sm:$0xf] %v1384
        %1897 = vst [vmem:[%s134 + $0x380] sm:$0xf] %v1385
        %1898 = vst [vmem:[%s134 + $0x384] sm:$0xf] %v1386
        %1899 = vst [vmem:[%s134 + $0x388] sm:$0xf] %v1387
        %1900 = vst [vmem:[%s134 + $0x38c] sm:$0xf] %v1388
        %1901 = vst [vmem:[%s134 + $0x390] sm:$0xf] %v1389
        %1902 = vst [vmem:[%s134 + $0x394] sm:$0xf] %v1390
        %1903 = vst [vmem:[%s134 + $0x398] sm:$0xf] %v1391
        %1904 = vst [vmem:[%s134 + $0x39c] sm:$0xf] %v1392
        %1905 = vst [vmem:[%s134 + $0x3a0] sm:$0xf] %v1393
        %1906 = vst [vmem:[%s134 + $0x3a4] sm:$0xf] %v1394
        %1907 = vst [vmem:[%s134 + $0x3a8] sm:$0xf] %v1395
        %1908 = vst [vmem:[%s134 + $0x3ac] sm:$0xf] %v1396
        %1909 = vst [vmem:[%s134 + $0x3b0] sm:$0xf] %v1397
        %1910 = vst [vmem:[%s134 + $0x3b4] sm:$0xf] %v1398
        %1911 = vst [vmem:[%s134 + $0x3b8] sm:$0xf] %v1399
        %1912 = vst [vmem:[%s134 + $0x3bc] sm:$0xf] %v1400
        %1913 = vst [vmem:[%s134 + $0x3c0] sm:$0xf] %v1401
        %1914 = vst [vmem:[%s134 + $0x3c4] sm:$0xf] %v1402
        %1915 = vst [vmem:[%s134 + $0x3c8] sm:$0xf] %v1403
        %1916 = vst [vmem:[%s134 + $0x3cc] sm:$0xf] %v1404
        %1917 = vst [vmem:[%s134 + $0x3d0] sm:$0xf] %v1405
        %1918 = vst [vmem:[%s134 + $0x3d4] sm:$0xf] %v1406
        %1919 = vst [vmem:[%s134 + $0x3d8] sm:$0xf] %v1407
        %1920 = vst [vmem:[%s134 + $0x3dc] sm:$0xf] %v1408
        %1921 = vst [vmem:[%s134 + $0x3e0] sm:$0xf] %v1409
        %1922 = vst [vmem:[%s134 + $0x3e4] sm:$0xf] %v1410
        %1923 = vst [vmem:[%s134 + $0x3e8] sm:$0xf] %v1411
        %1924 = vst [vmem:[%s134 + $0x3ec] sm:$0xf] %v1412
        %1925 = vst [vmem:[%s134 + $0x3f0] sm:$0xf] %v1413
        %1926 = vst [vmem:[%s134 + $0x3f4] sm:$0xf] %v1414
        %1927 = vst [vmem:[%s134 + $0x3f8] sm:$0xf] %v1415
        %1928 = vst [vmem:[%s134 + $0x3fc] sm:$0xf] %v1416
        %s1929 = sand.u32 %s52, 1
        %s1930 = scalar_lea.sflag [#allocation4], %s1929
        %s1931 = sand.u32 %s52, 1
        %s1932 = smul.addr %s1931, 1024
        %s1933 = scalar_lea.vmem [#allocation5], %s1932
        // Predicated region
        $region29: #{tpu_custom_call.1} parent=23 // pred_check
          %p1934 = pneg %p62
        $region30: #{tpu_custom_call.1} parent=23 // pred_check_branch
          %1936 = sbr.rel (%p1934) target = $region32
        $region31: #{tpu_custom_call.1} parent=23 // pred_region
          %s1937 = smul.u32 256, %s18
          %s1939 = ssub.s32 16384, 16384
          %1940 = vsyncadd %s1930, %s1939
          %s1941 = smul.addr %s1937, 64
          %s1942 = scalar_lea.hbm %s1, %s1941
          %s1943 = sshll.u32 %s1933, 4
          %s1944 = int_to_ptr.vmem [resolvable:$true] %s1943
          %1949 = dma.vmem_to_hbm [thread:$0]  %s1944, 16384, %s1942, %s1930, 64, 64, 4
        $region32: #{tpu_custom_call.1} parent=23 // pred_fallthru
          _
      $region24: #{tpu_custom_call.1} parent=5 // pred_fallthru
        _
      %p1950 = scmp.le.s32.totalorder 2, %s13
      // Predicated region
      $region33: #{tpu_custom_call.1} parent=5 // pred_check
        %p1951 = pneg %p1950
      $region34: #{tpu_custom_call.1} parent=5 // pred_check_branch
        %1953 = sbr.rel (%p1951) target = $region36
      $region35: #{tpu_custom_call.1} parent=5 // pred_region
        %s1954 = ssub.s32 %s13, 2
        // Predicated region
        $region37: #{tpu_custom_call.1} parent=35 // pred_check
          %p1955 = pneg %p68
        $region38: #{tpu_custom_call.1} parent=35 // pred_check_branch
          %1957 = sbr.rel (%p1955) target = $region40
        $region39: #{tpu_custom_call.1} parent=35 // pred_region
          %s1958 = sand.u32 %s53, 1
          %s1959 = scalar_lea.sflag [#allocation4], %s1958
          %s1960 = sand.u32 %s53, 1
          %s1961 = smul.addr %s1960, 1024
          %s1962 = scalar_lea.vmem [#allocation5], %s1961
          %1963 = dma.done %s1959, 16384
        $region40: #{tpu_custom_call.1} parent=35 // pred_fallthru
          _
      $region36: #{tpu_custom_call.1} parent=5 // pred_fallthru
        _
    $region6: #{tpu_custom_call.1} parent=1 // loop_footer
      %s17 = sadd.s32 1, %s13
    $region7: #{tpu_custom_call.1} parent=1 // loop_footer_branch
      %12 = sbr.rel target = $region3
    $region8: #{tpu_custom_call.1} parent=1 // loop_exit
      _
    %1964 = vsyncpa [#allocation3], 1
    %s1965 = scalar_lea.sflag [#allocation3], 1
    %1966 = vsyncpa %s1965, 1
    %1967 = vsyncpa [#allocation4], 1
    %s1968 = scalar_lea.sflag [#allocation4], 1
    %1969 = vsyncpa %s1968, 1

</llo_original>
